<compile_context>
chip_gen: v6e
topology: v6e:2x2x1
jax: 0.10.0
libtpu: 0.0.40
codegen_flags: <defaults>
</compile_context>

<pallas_src>
import jax
import jax.numpy as jnp
from jax.experimental import pallas as pl
from jax.experimental.pallas import tpu as pltpu

# ---------------- configuration (small, forward-consistent shapes) ----------------
B, F, T = 2, 32, 16        # batch, mel features, time frames
C, A, K = 64, 32, 5        # TDNN channels, attention bottleneck, conv kernel width
PAD = K // 2
THRESHOLD = 0.003
BC, BA, BF = B * C, B * A, B * F


# ---------------------------------- Pallas kernel ----------------------------------
def vad_kernel(x_ref, wc_ref, bc_ref, w1_ref, b1_ref, w2_ref, b2_ref, s_ref, csel_ref,
               out_ref):
    """Whole batch in one invocation; batch packed along sublanes, time on lanes.

    x_ref    : (B, F, T)        native PyTorch NCW input
    wc_ref   : (K*B*C, B*F)     block-diagonal conv weights, row (k, b, c), col (b, f)
    bc_ref   : (B*C, 1)         conv bias per (b, c) row (broadcast over time lanes)
    w1_ref   : (B*A, B*C), b1_ref: (B*A, 1)   attention bottleneck (block-diag conv1x1)
    w2_ref   : (B*C, B*A), b2_ref: (B*C, 1)   attention logits     (block-diag conv1x1)
    s_ref    : (K, T, T)        constant time-shift matrices (zero-padded conv taps)
    csel_ref : (B, B*C)         constant per-batch channel-sum selector
    out_ref  : (B, T)           per-frame VAD decision (0./1.)
    """
    # Collapse batch onto sublanes: (B, F, T) -> (B*F, T).  Row-major collapse of the leading
    # dim with F (=32) a multiple of the sublane tile, so this is a layout no-op.
    x2 = x_ref[...].reshape(BF, T)

    # --- all K conv-tap partial products in ONE matmul: rows ordered (k, b, c) ---
    p = jnp.dot(wc_ref[...], x2, preferred_element_type=jnp.float32)            # (K*B*C, T)

    # --- fold taps with constant (T, T) shift matrices on the MXU (no rolls, no unaligned
    #     lane slices); P slices are sublane-aligned (offsets are multiples of B*C = 128). ---
    h = jnp.dot(p[0:BC, :], s_ref[0], preferred_element_type=jnp.float32)
    for k in range(1, K):                                                        # K = 5, static
        h = h + jnp.dot(p[k * BC:(k + 1) * BC, :], s_ref[k],
                        preferred_element_type=jnp.float32)
    h = jnp.maximum(h + bc_ref[...], 0.0)                                        # (B*C, T) ReLU

    # --- attentive-statistics-pooling attention branch (block-diagonal 1x1 convs) ---
    a = jnp.tanh(jnp.dot(w1_ref[...], h, preferred_element_type=jnp.float32)
                 + b1_ref[...])                                                  # (B*A, T)
    logits = (jnp.dot(w2_ref[...], a, preferred_element_type=jnp.float32)
              + b2_ref[...])                                                     # (B*C, T)

    # --- softmax over time (lane axis), per (batch, channel) row: uniform, no segmentation ---
    m = jnp.max(logits, axis=1, keepdims=True)                                   # (B*C, 1)
    e = jnp.exp(logits - m)                                                      # (B*C, T)
    r = pl.reciprocal(jnp.sum(e, axis=1, keepdims=True), approx=True)            # EUP slot
    attn = e * r                                                                 # attention scores

    # --- mean over channels fused with threshold: per-batch channel sum on the MXU,
    #     compared against THRESHOLD * C; exactly ONE output store. ---
    ssum = jnp.dot(csel_ref[...], attn, preferred_element_type=jnp.float32)      # (B, T)
    out_ref[...] = (ssum > THRESHOLD * C).astype(jnp.float32)


# ------------------------------------ wrapper ------------------------------------
def prepare_params(wconv, bconv, w1, b1, w2, b2):
    """One-time weight re-layout (outside the jitted forward).

    wconv: (K, F, C), bconv: (1, C), w1: (C, A), b1: (1, A), w2: (A, C), b2: (1, C)
    """
    f32 = jnp.float32
    eye_b = jnp.eye(B, dtype=f32)

    # Conv taps, block-diagonal over batch: wc[(k,b,c), (b',f)] = wconv[k,f,c] * (b == b').
    wkc = jnp.transpose(wconv, (0, 2, 1)).astype(f32)                            # (K, C, F)
    wc = jnp.einsum("kcf,bd->kbcdf", wkc, eye_b).reshape(K * B * C, B * F)

    # Attention 1x1 convs, block-diagonal over batch.
    w1bd = jnp.einsum("ac,bd->badc", w1.T.astype(f32), eye_b).reshape(B * A, B * C)
    w2bd = jnp.einsum("ca,bd->bcda", w2.T.astype(f32), eye_b).reshape(B * C, B * A)

    # Biases replicated per batch row-block.
    bcv = jnp.tile(bconv.reshape(1, C), (B, 1)).reshape(B * C, 1).astype(f32)
    b1v = jnp.tile(b1.reshape(1, A), (B, 1)).reshape(B * A, 1).astype(f32)
    b2v = jnp.tile(b2.reshape(1, C), (B, 1)).reshape(B * C, 1).astype(f32)

    # Constant time-shift matrices implementing the zero-padded conv taps:
    #   S_k[t', t] = 1  iff  t' = t + k - PAD  (within [0, T)).
    s_stack = jnp.stack([jnp.eye(T, k=PAD - k, dtype=f32) for k in range(K)])    # (K, T, T)

    # Per-batch channel-sum selector: csel[b, (b', c)] = (b == b').
    csel = jnp.kron(eye_b, jnp.ones((1, C), dtype=f32))                          # (B, B*C)

    return wc, bcv, w1bd, b1v, w2bd, b2v, s_stack, csel


@jax.jit
def vad_forward(x_ncw, wc, bcv, w1bd, b1v, w2bd, b2v, s_stack, csel):
    """x_ncw: (B, F, T) float32, native PyTorch NCW layout. Returns (B, T) float32 VAD mask."""
    return pl.pallas_call(
        vad_kernel,
        out_shape=jax.ShapeDtypeStruct((B, T), jnp.float32),
        grid_spec=pltpu.PrefetchScalarGridSpec(
            num_scalar_prefetch=0,
            grid=(1,),                                              # single invocation
            in_specs=[
                pl.BlockSpec((B, F, T), lambda i: (0, 0, 0)),           # x, native layout
                pl.BlockSpec((K * B * C, B * F), lambda i: (0, 0)),     # conv weights (block-diag)
                pl.BlockSpec((B * C, 1), lambda i: (0, 0)),             # conv bias
                pl.BlockSpec((B * A, B * C), lambda i: (0, 0)),         # attn W1 (block-diag)
                pl.BlockSpec((B * A, 1), lambda i: (0, 0)),             # attn b1
                pl.BlockSpec((B * C, B * A), lambda i: (0, 0)),         # attn W2 (block-diag)
                pl.BlockSpec((B * C, 1), lambda i: (0, 0)),             # attn b2
                pl.BlockSpec((K, T, T), lambda i: (0, 0, 0)),           # shift matrices
                pl.BlockSpec((B, B * C), lambda i: (0, 0)),             # channel-sum selector
            ],
            out_specs=pl.BlockSpec((B, T), lambda i: (0, 0)),           # single (B, T) store
        ),
        compiler_params=pltpu.CompilerParams(dimension_semantics=("arbitrary",)),
    )(x_ncw, wc, bcv, w1bd, b1v, w2bd, b2v, s_stack, csel)


# --------------------------- pure-JAX reference (for check) ------------------------
def vad_reference(x_ncw, wconv, bconv, w1, b1, w2, b2):
    xt = jnp.transpose(x_ncw, (0, 2, 1))                      # (B, T, F)
    xp = jnp.pad(xt, ((0, 0), (PAD, PAD), (0, 0)))
    h = bconv.reshape(1, 1, C)
    for k in range(K):
        h = h + jnp.einsum("btf,fc->btc", xp[:, k:k + T, :], wconv[k])
    h = jnp.maximum(h, 0.0)
    a = jnp.tanh(jnp.einsum("btc,ca->bta", h, w1) + b1)
    logits = jnp.einsum("bta,ac->btc", a, w2) + b2             # (B, T, C)
    attn = jax.nn.softmax(logits, axis=1)                      # softmax over time
    scores = attn.mean(axis=2)                                 # mean over channels -> (B, T)
    return scores, (scores > THRESHOLD).astype(jnp.float32)


# ------------------------------------- main ---------------------------------------
if __name__ == "__main__":
    key = jax.random.PRNGKey(0)
    kx, k0, k1, k2, k3, k4, k5 = jax.random.split(key, 7)

    # deterministic synthetic parameters (shapes implied by the module structure)
    x = jax.random.normal(kx, (B, F, T), dtype=jnp.float32)    # PyTorch NCW input
    wconv = 0.05 * jax.random.normal(k0, (K, F, C), dtype=jnp.float32)
    bconv = 0.01 * jax.random.normal(k1, (1, C), dtype=jnp.float32)
    w1 = 0.05 * jax.random.normal(k2, (C, A), dtype=jnp.float32)
    b1 = 0.01 * jax.random.normal(k3, (1, A), dtype=jnp.float32)
    w2 = 0.05 * jax.random.normal(k4, (A, C), dtype=jnp.float32)
    b2 = 0.01 * jax.random.normal(k5, (1, C), dtype=jnp.float32)

    params = prepare_params(wconv, bconv, w1, b1, w2, b2)      # one-time weight re-layout

    out = vad_forward(x, *params)
    out = jax.block_until_ready(out)

    ref_scores, ref_mask = vad_reference(x, wconv, bconv, w1, b1, w2, b2)
    assert out.shape == (B, T), out.shape
    assert bool(jnp.all((out == 0.0) | (out == 1.0)))
    # Kernel and reference use different accumulation orders (and an approx reciprocal); only
    # require the binary mask to agree where the reference score is not within rounding of the
    # threshold.
    decided = jnp.abs(ref_scores - THRESHOLD) > 1e-5
    assert bool(jnp.all(jnp.where(decided, out == ref_mask, True))), (out, ref_mask, ref_scores)

    print("KERNEL_OK")
</pallas_src>

<mosaic_0001>
module attributes {stable_mosaic.version = 11 : i64} {
  func.func @vad_kernel(%arg0: i32, %arg1: memref<2x32x16xf32, #tpu.memory_space<vmem>>, %arg2: memref<640x64xf32, #tpu.memory_space<vmem>>, %arg3: memref<128x1xf32, #tpu.memory_space<vmem>>, %arg4: memref<64x128xf32, #tpu.memory_space<vmem>>, %arg5: memref<64x1xf32, #tpu.memory_space<vmem>>, %arg6: memref<128x64xf32, #tpu.memory_space<vmem>>, %arg7: memref<128x1xf32, #tpu.memory_space<vmem>>, %arg8: memref<5x16x16xf32, #tpu.memory_space<vmem>>, %arg9: memref<2x128xf32, #tpu.memory_space<vmem>>, %arg10: memref<2x16xf32, #tpu.memory_space<vmem>>) attributes {dimension_semantics = [#tpu.dimension_semantics<arbitrary>], iteration_bounds = array<i64: 1>, scalar_prefetch = 0 : i64, scratch_operands = 0 : i64, tpu.core_type = #tpu.core_type<tc>, window_params = [{pipeline_mode = #tpu.pipeline_mode<synchronous>, transform_indices = @transform_0, window_bounds = array<i64: 2, 32, 16>}, {pipeline_mode = #tpu.pipeline_mode<synchronous>, transform_indices = @transform_1, window_bounds = array<i64: 640, 64>}, {pipeline_mode = #tpu.pipeline_mode<synchronous>, transform_indices = @transform_2, window_bounds = array<i64: 128, 1>}, {pipeline_mode = #tpu.pipeline_mode<synchronous>, transform_indices = @transform_3, window_bounds = array<i64: 64, 128>}, {pipeline_mode = #tpu.pipeline_mode<synchronous>, transform_indices = @transform_4, window_bounds = array<i64: 64, 1>}, {pipeline_mode = #tpu.pipeline_mode<synchronous>, transform_indices = @transform_5, window_bounds = array<i64: 128, 64>}, {pipeline_mode = #tpu.pipeline_mode<synchronous>, transform_indices = @transform_6, window_bounds = array<i64: 128, 1>}, {pipeline_mode = #tpu.pipeline_mode<synchronous>, transform_indices = @transform_7, window_bounds = array<i64: 5, 16, 16>}, {pipeline_mode = #tpu.pipeline_mode<synchronous>, transform_indices = @transform_8, window_bounds = array<i64: 2, 128>}, {pipeline_mode = #tpu.pipeline_mode<synchronous>, transform_indices = @transform_9, window_bounds = array<i64: 2, 16>}]} {
    %c0 = arith.constant 0 : index
    %c0_0 = arith.constant 0 : index
    %c0_1 = arith.constant 0 : index
    %0 = vector.load %arg1[%c0, %c0_0, %c0_1] : memref<2x32x16xf32, #tpu.memory_space<vmem>>, vector<2x32x16xf32>
    %1 = vector.shape_cast %0 : vector<2x32x16xf32> to vector<64x16xf32>
    %c0_2 = arith.constant 0 : index
    %c0_3 = arith.constant 0 : index
    %2 = vector.load %arg2[%c0_2, %c0_3] : memref<640x64xf32, #tpu.memory_space<vmem>>, vector<640x64xf32>
    %cst = arith.constant dense<0.000000e+00> : vector<640x16xf32>
    %3 = tpu.matmul %2, %1, %cst {dimension_numbers = #tpu.dot_dimension_numbers<[1], [0], [0], [1], [0, 0, 1, 1], [], []>} : vector<640x64xf32>, vector<64x16xf32>, vector<640x16xf32> -> vector<640x16xf32>
    %4 = vector.extract_strided_slice %3 {offsets = [0, 0], sizes = [128, 16], strides = [1, 1]} : vector<640x16xf32> to vector<128x16xf32>
    %c0_4 = arith.constant 0 : index
    %c0_5 = arith.constant 0 : index
    %c0_6 = arith.constant 0 : index
    %5 = vector.load %arg8[%c0_4, %c0_5, %c0_6] : memref<5x16x16xf32, #tpu.memory_space<vmem>>, vector<1x16x16xf32>
    %6 = vector.shape_cast %5 : vector<1x16x16xf32> to vector<16x16xf32>
    %cst_7 = arith.constant dense<0.000000e+00> : vector<128x16xf32>
    %7 = tpu.matmul %4, %6, %cst_7 {dimension_numbers = #tpu.dot_dimension_numbers<[1], [0], [0], [1], [0, 0, 1, 1], [], []>} : vector<128x16xf32>, vector<16x16xf32>, vector<128x16xf32> -> vector<128x16xf32>
    %8 = vector.extract_strided_slice %3 {offsets = [128, 0], sizes = [128, 16], strides = [1, 1]} : vector<640x16xf32> to vector<128x16xf32>
    %c1 = arith.constant 1 : index
    %c0_8 = arith.constant 0 : index
    %c0_9 = arith.constant 0 : index
    %9 = vector.load %arg8[%c1, %c0_8, %c0_9] : memref<5x16x16xf32, #tpu.memory_space<vmem>>, vector<1x16x16xf32>
    %10 = vector.shape_cast %9 : vector<1x16x16xf32> to vector<16x16xf32>
    %cst_10 = arith.constant dense<0.000000e+00> : vector<128x16xf32>
    %11 = tpu.matmul %8, %10, %cst_10 {dimension_numbers = #tpu.dot_dimension_numbers<[1], [0], [0], [1], [0, 0, 1, 1], [], []>} : vector<128x16xf32>, vector<16x16xf32>, vector<128x16xf32> -> vector<128x16xf32>
    %12 = arith.addf %7, %11 : vector<128x16xf32>
    %13 = vector.extract_strided_slice %3 {offsets = [256, 0], sizes = [128, 16], strides = [1, 1]} : vector<640x16xf32> to vector<128x16xf32>
    %c2 = arith.constant 2 : index
    %c0_11 = arith.constant 0 : index
    %c0_12 = arith.constant 0 : index
    %14 = vector.load %arg8[%c2, %c0_11, %c0_12] : memref<5x16x16xf32, #tpu.memory_space<vmem>>, vector<1x16x16xf32>
    %15 = vector.shape_cast %14 : vector<1x16x16xf32> to vector<16x16xf32>
    %cst_13 = arith.constant dense<0.000000e+00> : vector<128x16xf32>
    %16 = tpu.matmul %13, %15, %cst_13 {dimension_numbers = #tpu.dot_dimension_numbers<[1], [0], [0], [1], [0, 0, 1, 1], [], []>} : vector<128x16xf32>, vector<16x16xf32>, vector<128x16xf32> -> vector<128x16xf32>
    %17 = arith.addf %12, %16 : vector<128x16xf32>
    %18 = vector.extract_strided_slice %3 {offsets = [384, 0], sizes = [128, 16], strides = [1, 1]} : vector<640x16xf32> to vector<128x16xf32>
    %c3 = arith.constant 3 : index
    %c0_14 = arith.constant 0 : index
    %c0_15 = arith.constant 0 : index
    %19 = vector.load %arg8[%c3, %c0_14, %c0_15] : memref<5x16x16xf32, #tpu.memory_space<vmem>>, vector<1x16x16xf32>
    %20 = vector.shape_cast %19 : vector<1x16x16xf32> to vector<16x16xf32>
    %cst_16 = arith.constant dense<0.000000e+00> : vector<128x16xf32>
    %21 = tpu.matmul %18, %20, %cst_16 {dimension_numbers = #tpu.dot_dimension_numbers<[1], [0], [0], [1], [0, 0, 1, 1], [], []>} : vector<128x16xf32>, vector<16x16xf32>, vector<128x16xf32> -> vector<128x16xf32>
    %22 = arith.addf %17, %21 : vector<128x16xf32>
    %23 = vector.extract_strided_slice %3 {offsets = [512, 0], sizes = [128, 16], strides = [1, 1]} : vector<640x16xf32> to vector<128x16xf32>
    %c4 = arith.constant 4 : index
    %c0_17 = arith.constant 0 : index
    %c0_18 = arith.constant 0 : index
    %24 = vector.load %arg8[%c4, %c0_17, %c0_18] : memref<5x16x16xf32, #tpu.memory_space<vmem>>, vector<1x16x16xf32>
    %25 = vector.shape_cast %24 : vector<1x16x16xf32> to vector<16x16xf32>
    %cst_19 = arith.constant dense<0.000000e+00> : vector<128x16xf32>
    %26 = tpu.matmul %23, %25, %cst_19 {dimension_numbers = #tpu.dot_dimension_numbers<[1], [0], [0], [1], [0, 0, 1, 1], [], []>} : vector<128x16xf32>, vector<16x16xf32>, vector<128x16xf32> -> vector<128x16xf32>
    %27 = arith.addf %22, %26 : vector<128x16xf32>
    %c0_20 = arith.constant 0 : index
    %c0_21 = arith.constant 0 : index
    %28 = vector.load %arg3[%c0_20, %c0_21] : memref<128x1xf32, #tpu.memory_space<vmem>>, vector<128x1xf32>
    %29 = vector.broadcast %28 : vector<128x1xf32> to vector<128x16xf32>
    %30 = arith.addf %27, %29 : vector<128x16xf32>
    %cst_22 = arith.constant 0.000000e+00 : f32
    %31 = vector.broadcast %cst_22 : f32 to vector<128x16xf32>
    %32 = arith.maximumf %30, %31 : vector<128x16xf32>
    %c0_23 = arith.constant 0 : index
    %c0_24 = arith.constant 0 : index
    %33 = vector.load %arg4[%c0_23, %c0_24] : memref<64x128xf32, #tpu.memory_space<vmem>>, vector<64x128xf32>
    %cst_25 = arith.constant dense<0.000000e+00> : vector<64x16xf32>
    %34 = tpu.matmul %33, %32, %cst_25 {dimension_numbers = #tpu.dot_dimension_numbers<[1], [0], [0], [1], [0, 0, 1, 1], [], []>} : vector<64x128xf32>, vector<128x16xf32>, vector<64x16xf32> -> vector<64x16xf32>
    %c0_26 = arith.constant 0 : index
    %c0_27 = arith.constant 0 : index
    %35 = vector.load %arg5[%c0_26, %c0_27] : memref<64x1xf32, #tpu.memory_space<vmem>>, vector<64x1xf32>
    %36 = vector.broadcast %35 : vector<64x1xf32> to vector<64x16xf32>
    %37 = arith.addf %34, %36 : vector<64x16xf32>
    %38 = math.tanh %37 : vector<64x16xf32>
    %c0_28 = arith.constant 0 : index
    %c0_29 = arith.constant 0 : index
    %39 = vector.load %arg6[%c0_28, %c0_29] : memref<128x64xf32, #tpu.memory_space<vmem>>, vector<128x64xf32>
    %cst_30 = arith.constant dense<0.000000e+00> : vector<128x16xf32>
    %40 = tpu.matmul %39, %38, %cst_30 {dimension_numbers = #tpu.dot_dimension_numbers<[1], [0], [0], [1], [0, 0, 1, 1], [], []>} : vector<128x64xf32>, vector<64x16xf32>, vector<128x16xf32> -> vector<128x16xf32>
    %c0_31 = arith.constant 0 : index
    %c0_32 = arith.constant 0 : index
    %41 = vector.load %arg7[%c0_31, %c0_32] : memref<128x1xf32, #tpu.memory_space<vmem>>, vector<128x1xf32>
    %42 = vector.broadcast %41 : vector<128x1xf32> to vector<128x16xf32>
    %43 = arith.addf %40, %42 : vector<128x16xf32>
    %cst_33 = arith.constant dense<0xFF800000> : vector<128xf32>
    %44 = vector.multi_reduction <maximumf>, %43, %cst_33 [1] : vector<128x16xf32> to vector<128xf32>
    %45 = vector.shape_cast %44 : vector<128xf32> to vector<128x1xf32>
    %46 = vector.broadcast %45 : vector<128x1xf32> to vector<128x16xf32>
    %47 = arith.subf %43, %46 : vector<128x16xf32>
    %48 = math.exp %47 : vector<128x16xf32>
    %cst_34 = arith.constant dense<0.000000e+00> : vector<128xf32>
    %49 = vector.multi_reduction <add>, %48, %cst_34 [1] : vector<128x16xf32> to vector<128xf32>
    %50 = vector.shape_cast %49 : vector<128xf32> to vector<128x1xf32>
    %51 = tpu.reciprocal %50 {approx = true} : vector<128x1xf32> -> vector<128x1xf32>
    %52 = vector.broadcast %51 : vector<128x1xf32> to vector<128x16xf32>
    %53 = arith.mulf %48, %52 : vector<128x16xf32>
    %c0_35 = arith.constant 0 : index
    %c0_36 = arith.constant 0 : index
    %54 = vector.load %arg9[%c0_35, %c0_36] : memref<2x128xf32, #tpu.memory_space<vmem>>, vector<2x128xf32>
    %cst_37 = arith.constant dense<0.000000e+00> : vector<2x16xf32>
    %55 = tpu.matmul %54, %53, %cst_37 {dimension_numbers = #tpu.dot_dimension_numbers<[1], [0], [0], [1], [0, 0, 1, 1], [], []>} : vector<2x128xf32>, vector<128x16xf32>, vector<2x16xf32> -> vector<2x16xf32>
    %cst_38 = arith.constant 1.920000e-01 : f32
    %56 = vector.broadcast %cst_38 : f32 to vector<2x16xf32>
    %57 = arith.cmpf ogt, %55, %56 : vector<2x16xf32>
    %58 = arith.extui %57 : vector<2x16xi1> to vector<2x16xi32>
    %59 = arith.sitofp %58 : vector<2x16xi32> to vector<2x16xf32>
    %c0_39 = arith.constant 0 : index
    %c0_40 = arith.constant 0 : index
    %60 = vector.load %arg10[%c0_39, %c0_40] : memref<2x16xf32, #tpu.memory_space<vmem>>, vector<2x16xf32>
    tpu.vector_store %arg10[%c0_39, %c0_40], %59 {strides = array<i32>} : memref<2x16xf32, #tpu.memory_space<vmem>>, vector<2x16xf32>,
    return
  }
  func.func @transform_0(%arg0: i32) -> (i32, i32, i32) {
    %c0_i32 = arith.constant 0 : i32
    %c0_i32_0 = arith.constant 0 : i32
    %c0_i32_1 = arith.constant 0 : i32
    %c0_i32_2 = arith.constant 0 : i32
    return %c0_i32, %c0_i32_0, %c0_i32_1 : i32, i32, i32
  }
  func.func @transform_1(%arg0: i32) -> (i32, i32) {
    %c0_i32 = arith.constant 0 : i32
    %c0_i32_0 = arith.constant 0 : i32
    %c0_i32_1 = arith.constant 0 : i32
    return %c0_i32, %c0_i32_0 : i32, i32
  }
  func.func @transform_2(%arg0: i32) -> (i32, i32) {
    %c0_i32 = arith.constant 0 : i32
    %c0_i32_0 = arith.constant 0 : i32
    %c0_i32_1 = arith.constant 0 : i32
    return %c0_i32, %c0_i32_0 : i32, i32
  }
  func.func @transform_3(%arg0: i32) -> (i32, i32) {
    %c0_i32 = arith.constant 0 : i32
    %c0_i32_0 = arith.constant 0 : i32
    %c0_i32_1 = arith.constant 0 : i32
    return %c0_i32, %c0_i32_0 : i32, i32
  }
  func.func @transform_4(%arg0: i32) -> (i32, i32) {
    %c0_i32 = arith.constant 0 : i32
    %c0_i32_0 = arith.constant 0 : i32
    %c0_i32_1 = arith.constant 0 : i32
    return %c0_i32, %c0_i32_0 : i32, i32
  }
  func.func @transform_5(%arg0: i32) -> (i32, i32) {
    %c0_i32 = arith.constant 0 : i32
    %c0_i32_0 = arith.constant 0 : i32
    %c0_i32_1 = arith.constant 0 : i32
    return %c0_i32, %c0_i32_0 : i32, i32
  }
  func.func @transform_6(%arg0: i32) -> (i32, i32) {
    %c0_i32 = arith.constant 0 : i32
    %c0_i32_0 = arith.constant 0 : i32
    %c0_i32_1 = arith.constant 0 : i32
    return %c0_i32, %c0_i32_0 : i32, i32
  }
  func.func @transform_7(%arg0: i32) -> (i32, i32, i32) {
    %c0_i32 = arith.constant 0 : i32
    %c0_i32_0 = arith.constant 0 : i32
    %c0_i32_1 = arith.constant 0 : i32
    %c0_i32_2 = arith.constant 0 : i32
    return %c0_i32, %c0_i32_0, %c0_i32_1 : i32, i32, i32
  }
  func.func @transform_8(%arg0: i32) -> (i32, i32) {
    %c0_i32 = arith.constant 0 : i32
    %c0_i32_0 = arith.constant 0 : i32
    %c0_i32_1 = arith.constant 0 : i32
    return %c0_i32, %c0_i32_0 : i32, i32
  }
  func.func @transform_9(%arg0: i32) -> (i32, i32) {
    %c0_i32 = arith.constant 0 : i32
    %c0_i32_0 = arith.constant 0 : i32
    %c0_i32_1 = arith.constant 0 : i32
    return %c0_i32, %c0_i32_0 : i32, i32
  }
}

</mosaic_0001>

<llo_original>
// kernel: vad_forward.1
$region0: #{vad_forward.1}
  #allocation0 [shape = 'u32[]', space=smem, size = 0x4, offset = 0x4, fixed_abs, tag = 'smem constant byte address 0x4 - core index']
  #allocation1 [shape = 'u32[144,128]{1,0:T(1,128)}', space=vmem, size = 0x12000, scoped, tag = 'internal scratch']
  %s0 = inlined_call_operand.vmem [shape: f32[2,32,16], index: 0, kind: input, shape index: {}]
  %s1 = inlined_call_operand.vmem [shape: f32[640,64], index: 1, kind: input, shape index: {}]
  %s2 = inlined_call_operand.vmem [shape: f32[128,1], index: 2, kind: input, shape index: {}]
  %s3 = inlined_call_operand.vmem [shape: f32[64,128], index: 3, kind: input, shape index: {}]
  %s4 = inlined_call_operand.vmem [shape: f32[64,1], index: 4, kind: input, shape index: {}]
  %s5 = inlined_call_operand.vmem [shape: f32[128,64], index: 5, kind: input, shape index: {}]
  %s6 = inlined_call_operand.vmem [shape: f32[128,1], index: 6, kind: input, shape index: {}]
  %s7 = inlined_call_operand.vmem [shape: f32[5,16,16], index: 7, kind: input, shape index: {}]
  %s8 = inlined_call_operand.vmem [shape: f32[2,128], index: 8, kind: input, shape index: {}]
  %s9 = inlined_call_operand.hbm [shape: f32[2,16], index: 9, kind: output, shape index: {}]
  %s10 = sld [smem:[#allocation0]]
  $region46: #{vad_forward.1} parent=0
    _
  %s12 = ssub.s32 1, %s10
  %s13 = scalar_select 0, %s12, %s10
  $region1: #{vad_forward.1} parent=0
    #allocation2 [shape = 'u8[1024]{0}', space=vmem, size = 0x400, scoped, tag = 'output window, operand 0, single buffered']
    #allocation3 [shape = 's32[1]{0}', space=sflag, size = 0x4, scoped, tag = 'scoped memory for vad_forward.1']
    %14 = vsyncpa [#allocation3], 0
    // Predicated region
    $region2: #{vad_forward.1} parent=1 // pred_check
      _
    $region3: #{vad_forward.1} parent=1 // pred_check_branch
      %16 = sbr.rel (0) target = $region5
    $region4: #{vad_forward.1} parent=1 // pred_region
      _
    $region5: #{vad_forward.1} parent=1 // pred_fallthru
      _
    // Predicated region
    $region6: #{vad_forward.1} parent=1 // pred_check
      _
    $region7: #{vad_forward.1} parent=1 // pred_check_branch
      %18 = sbr.rel (0) target = $region9
    $region8: #{vad_forward.1} parent=1 // pred_region
      _
    $region9: #{vad_forward.1} parent=1 // pred_fallthru
      _
    // Predicated region
    $region10: #{vad_forward.1} parent=1 // pred_check
      _
    $region11: #{vad_forward.1} parent=1 // pred_check_branch
      %20 = sbr.rel (0) target = $region13
    $region12: #{vad_forward.1} parent=1 // pred_region
      _
    $region13: #{vad_forward.1} parent=1 // pred_fallthru
      _
    // Predicated region
    $region14: #{vad_forward.1} parent=1 // pred_check
      _
    $region15: #{vad_forward.1} parent=1 // pred_check_branch
      %22 = sbr.rel (0) target = $region17
    $region16: #{vad_forward.1} parent=1 // pred_region
      _
    $region17: #{vad_forward.1} parent=1 // pred_fallthru
      _
    // Predicated region
    $region18: #{vad_forward.1} parent=1 // pred_check
      _
    $region19: #{vad_forward.1} parent=1 // pred_check_branch
      %24 = sbr.rel (0) target = $region21
    $region20: #{vad_forward.1} parent=1 // pred_region
      _
    $region21: #{vad_forward.1} parent=1 // pred_fallthru
      _
    // Predicated region
    $region22: #{vad_forward.1} parent=1 // pred_check
      _
    $region23: #{vad_forward.1} parent=1 // pred_check_branch
      %26 = sbr.rel (0) target = $region25
    $region24: #{vad_forward.1} parent=1 // pred_region
      _
    $region25: #{vad_forward.1} parent=1 // pred_fallthru
      _
    // Predicated region
    $region26: #{vad_forward.1} parent=1 // pred_check
      _
    $region27: #{vad_forward.1} parent=1 // pred_check_branch
      %28 = sbr.rel (0) target = $region29
    $region28: #{vad_forward.1} parent=1 // pred_region
      _
    $region29: #{vad_forward.1} parent=1 // pred_fallthru
      _
    // Predicated region
    $region30: #{vad_forward.1} parent=1 // pred_check
      _
    $region31: #{vad_forward.1} parent=1 // pred_check_branch
      %30 = sbr.rel (0) target = $region33
    $region32: #{vad_forward.1} parent=1 // pred_region
      _
    $region33: #{vad_forward.1} parent=1 // pred_fallthru
      _
    // Predicated region
    $region34: #{vad_forward.1} parent=1 // pred_check
      _
    $region35: #{vad_forward.1} parent=1 // pred_check_branch
      %32 = sbr.rel (0) target = $region37
    $region36: #{vad_forward.1} parent=1 // pred_region
      _
    $region37: #{vad_forward.1} parent=1 // pred_fallthru
      _
    %v33 = vld [vmem:[%s0] sm:$0xff]
    %v34 = vld [vmem:[%s0 + $0x8] sm:$0xff]
    %v35 = vld [vmem:[%s0 + $0x10] sm:$0xff]
    %v36 = vld [vmem:[%s0 + $0x18] sm:$0xff]
    %v37 = vld [vmem:[%s0 + $0x20] sm:$0xff]
    %v38 = vld [vmem:[%s0 + $0x28] sm:$0xff]
    %v39 = vld [vmem:[%s0 + $0x30] sm:$0xff]
    %v40 = vld [vmem:[%s0 + $0x38] sm:$0xff]
    %v41 = vld [vmem:[%s1] sm:$0xff]
    %v42 = vld [vmem:[%s1 + $0x8] sm:$0xff]
    %v43 = vld [vmem:[%s1 + $0x10] sm:$0xff]
    %v44 = vld [vmem:[%s1 + $0x18] sm:$0xff]
    %v45 = vld [vmem:[%s1 + $0x20] sm:$0xff]
    %v46 = vld [vmem:[%s1 + $0x28] sm:$0xff]
    %v47 = vld [vmem:[%s1 + $0x30] sm:$0xff]
    %v48 = vld [vmem:[%s1 + $0x38] sm:$0xff]
    %v49 = vld [vmem:[%s1 + $0x40] sm:$0xff]
    %v50 = vld [vmem:[%s1 + $0x48] sm:$0xff]
    %v51 = vld [vmem:[%s1 + $0x50] sm:$0xff]
    %v52 = vld [vmem:[%s1 + $0x58] sm:$0xff]
    %v53 = vld [vmem:[%s1 + $0x60] sm:$0xff]
    %v54 = vld [vmem:[%s1 + $0x68] sm:$0xff]
    %v55 = vld [vmem:[%s1 + $0x70] sm:$0xff]
    %v56 = vld [vmem:[%s1 + $0x78] sm:$0xff]
    %v57 = vld [vmem:[%s1 + $0x80] sm:$0xff]
    %v58 = vld [vmem:[%s1 + $0x88] sm:$0xff]
    %v59 = vld [vmem:[%s1 + $0x90] sm:$0xff]
    %v60 = vld [vmem:[%s1 + $0x98] sm:$0xff]
    %v61 = vld [vmem:[%s1 + $0xa0] sm:$0xff]
    %v62 = vld [vmem:[%s1 + $0xa8] sm:$0xff]
    %v63 = vld [vmem:[%s1 + $0xb0] sm:$0xff]
    %v64 = vld [vmem:[%s1 + $0xb8] sm:$0xff]
    %v65 = vld [vmem:[%s1 + $0xc0] sm:$0xff]
    %v66 = vld [vmem:[%s1 + $0xc8] sm:$0xff]
    %v67 = vld [vmem:[%s1 + $0xd0] sm:$0xff]
    %v68 = vld [vmem:[%s1 + $0xd8] sm:$0xff]
    %v69 = vld [vmem:[%s1 + $0xe0] sm:$0xff]
    %v70 = vld [vmem:[%s1 + $0xe8] sm:$0xff]
    %v71 = vld [vmem:[%s1 + $0xf0] sm:$0xff]
    %v72 = vld [vmem:[%s1 + $0xf8] sm:$0xff]
    %v73 = vld [vmem:[%s1 + $0x100] sm:$0xff]
    %v74 = vld [vmem:[%s1 + $0x108] sm:$0xff]
    %v75 = vld [vmem:[%s1 + $0x110] sm:$0xff]
    %v76 = vld [vmem:[%s1 + $0x118] sm:$0xff]
    %v77 = vld [vmem:[%s1 + $0x120] sm:$0xff]
    %v78 = vld [vmem:[%s1 + $0x128] sm:$0xff]
    %v79 = vld [vmem:[%s1 + $0x130] sm:$0xff]
    %v80 = vld [vmem:[%s1 + $0x138] sm:$0xff]
    %v81 = vld [vmem:[%s1 + $0x140] sm:$0xff]
    %v82 = vld [vmem:[%s1 + $0x148] sm:$0xff]
    %v83 = vld [vmem:[%s1 + $0x150] sm:$0xff]
    %v84 = vld [vmem:[%s1 + $0x158] sm:$0xff]
    %v85 = vld [vmem:[%s1 + $0x160] sm:$0xff]
    %v86 = vld [vmem:[%s1 + $0x168] sm:$0xff]
    %v87 = vld [vmem:[%s1 + $0x170] sm:$0xff]
    %v88 = vld [vmem:[%s1 + $0x178] sm:$0xff]
    %v89 = vld [vmem:[%s1 + $0x180] sm:$0xff]
    %v90 = vld [vmem:[%s1 + $0x188] sm:$0xff]
    %v91 = vld [vmem:[%s1 + $0x190] sm:$0xff]
    %v92 = vld [vmem:[%s1 + $0x198] sm:$0xff]
    %v93 = vld [vmem:[%s1 + $0x1a0] sm:$0xff]
    %v94 = vld [vmem:[%s1 + $0x1a8] sm:$0xff]
    %v95 = vld [vmem:[%s1 + $0x1b0] sm:$0xff]
    %v96 = vld [vmem:[%s1 + $0x1b8] sm:$0xff]
    %v97 = vld [vmem:[%s1 + $0x1c0] sm:$0xff]
    %v98 = vld [vmem:[%s1 + $0x1c8] sm:$0xff]
    %v99 = vld [vmem:[%s1 + $0x1d0] sm:$0xff]
    %v100 = vld [vmem:[%s1 + $0x1d8] sm:$0xff]
    %v101 = vld [vmem:[%s1 + $0x1e0] sm:$0xff]
    %v102 = vld [vmem:[%s1 + $0x1e8] sm:$0xff]
    %v103 = vld [vmem:[%s1 + $0x1f0] sm:$0xff]
    %v104 = vld [vmem:[%s1 + $0x1f8] sm:$0xff]
    %v105 = vld [vmem:[%s1 + $0x200] sm:$0xff]
    %v106 = vld [vmem:[%s1 + $0x208] sm:$0xff]
    %v107 = vld [vmem:[%s1 + $0x210] sm:$0xff]
    %v108 = vld [vmem:[%s1 + $0x218] sm:$0xff]
    %v109 = vld [vmem:[%s1 + $0x220] sm:$0xff]
    %v110 = vld [vmem:[%s1 + $0x228] sm:$0xff]
    %v111 = vld [vmem:[%s1 + $0x230] sm:$0xff]
    %v112 = vld [vmem:[%s1 + $0x238] sm:$0xff]
    %v113 = vld [vmem:[%s1 + $0x240] sm:$0xff]
    %v114 = vld [vmem:[%s1 + $0x248] sm:$0xff]
    %v115 = vld [vmem:[%s1 + $0x250] sm:$0xff]
    %v116 = vld [vmem:[%s1 + $0x258] sm:$0xff]
    %v117 = vld [vmem:[%s1 + $0x260] sm:$0xff]
    %v118 = vld [vmem:[%s1 + $0x268] sm:$0xff]
    %v119 = vld [vmem:[%s1 + $0x270] sm:$0xff]
    %v120 = vld [vmem:[%s1 + $0x278] sm:$0xff]
    %vm121 = vcmask 523264
    %v123 = vsel %vm121, %v41, 0
    %v126 = vsel %vm121, %v42, 0
    %v129 = vsel %vm121, %v43, 0
    %v132 = vsel %vm121, %v44, 0
    %v135 = vsel %vm121, %v45, 0
    %v138 = vsel %vm121, %v46, 0
    %v141 = vsel %vm121, %v47, 0
    %v144 = vsel %vm121, %v48, 0
    %v147 = vsel %vm121, %v49, 0
    %v150 = vsel %vm121, %v50, 0
    %v153 = vsel %vm121, %v51, 0
    %v156 = vsel %vm121, %v52, 0
    %v159 = vsel %vm121, %v53, 0
    %v162 = vsel %vm121, %v54, 0
    %v165 = vsel %vm121, %v55, 0
    %v168 = vsel %vm121, %v56, 0
    %v171 = vsel %vm121, %v57, 0
    %v174 = vsel %vm121, %v58, 0
    %v177 = vsel %vm121, %v59, 0
    %v180 = vsel %vm121, %v60, 0
    %v183 = vsel %vm121, %v61, 0
    %v186 = vsel %vm121, %v62, 0
    %v189 = vsel %vm121, %v63, 0
    %v192 = vsel %vm121, %v64, 0
    %v195 = vsel %vm121, %v65, 0
    %v198 = vsel %vm121, %v66, 0
    %v201 = vsel %vm121, %v67, 0
    %v204 = vsel %vm121, %v68, 0
    %v207 = vsel %vm121, %v69, 0
    %v210 = vsel %vm121, %v70, 0
    %v213 = vsel %vm121, %v71, 0
    %v216 = vsel %vm121, %v72, 0
    %v219 = vsel %vm121, %v73, 0
    %v222 = vsel %vm121, %v74, 0
    %v225 = vsel %vm121, %v75, 0
    %v228 = vsel %vm121, %v76, 0
    %v231 = vsel %vm121, %v77, 0
    %v234 = vsel %vm121, %v78, 0
    %v237 = vsel %vm121, %v79, 0
    %v240 = vsel %vm121, %v80, 0
    %v243 = vsel %vm121, %v81, 0
    %v246 = vsel %vm121, %v82, 0
    %v249 = vsel %vm121, %v83, 0
    %v252 = vsel %vm121, %v84, 0
    %v255 = vsel %vm121, %v85, 0
    %v258 = vsel %vm121, %v86, 0
    %v261 = vsel %vm121, %v87, 0
    %v264 = vsel %vm121, %v88, 0
    %v267 = vsel %vm121, %v89, 0
    %v270 = vsel %vm121, %v90, 0
    %v273 = vsel %vm121, %v91, 0
    %v276 = vsel %vm121, %v92, 0
    %v279 = vsel %vm121, %v93, 0
    %v282 = vsel %vm121, %v94, 0
    %v285 = vsel %vm121, %v95, 0
    %v288 = vsel %vm121, %v96, 0
    %v291 = vsel %vm121, %v97, 0
    %v294 = vsel %vm121, %v98, 0
    %v297 = vsel %vm121, %v99, 0
    %v300 = vsel %vm121, %v100, 0
    %v303 = vsel %vm121, %v101, 0
    %v306 = vsel %vm121, %v102, 0
    %v309 = vsel %vm121, %v103, 0
    %v312 = vsel %vm121, %v104, 0
    %v315 = vsel %vm121, %v105, 0
    %v318 = vsel %vm121, %v106, 0
    %v321 = vsel %vm121, %v107, 0
    %v324 = vsel %vm121, %v108, 0
    %v327 = vsel %vm121, %v109, 0
    %v330 = vsel %vm121, %v110, 0
    %v333 = vsel %vm121, %v111, 0
    %v336 = vsel %vm121, %v112, 0
    %v339 = vsel %vm121, %v113, 0
    %v342 = vsel %vm121, %v114, 0
    %v345 = vsel %vm121, %v115, 0
    %v348 = vsel %vm121, %v116, 0
    %v351 = vsel %vm121, %v117, 0
    %v354 = vsel %vm121, %v118, 0
    %v357 = vsel %vm121, %v119, 0
    %v360 = vsel %vm121, %v120, 0
    %362 = vmatprep.subr.mxu0 0.0
    %363 = vmatpush1.msra.mxu0 0.0
    %364 = vmatprep.subr.mxu0 0.0
    %365 = vmatpush1.msra.mxu0 0.0
    %366 = vmatprep.subr.mxu0 0.0
    %367 = vmatpush1.msra.mxu0 0.0
    %368 = vmatprep.subr.mxu0 0.0
    %369 = vmatpush1.msra.mxu0 0.0
    %370 = vmatprep.subr.mxu0 0.0
    %371 = vmatpush1.msra.mxu0 0.0
    %372 = vmatprep.subr.mxu0 0.0
    %373 = vmatpush1.msra.mxu0 0.0
    %374 = vmatprep.subr.mxu0 0.0
    %375 = vmatpush1.msra.mxu0 0.0
    %376 = vmatprep.subr.mxu0 0.0
    %377 = vmatpush1.msra.mxu0 0.0
    %378 = vmatprep.subr.mxu0 0.0
    %379 = vmatpush1.msra.mxu0 %v40
    %380 = vmatprep.subr.mxu0 0.0
    %381 = vmatpush1.msra.mxu0 %v39
    %382 = vmatprep.subr.mxu0 0.0
    %383 = vmatpush1.msra.mxu0 %v38
    %384 = vmatprep.subr.mxu0 0.0
    %385 = vmatpush1.msra.mxu0 %v37
    %386 = vmatprep.subr.mxu0 0.0
    %387 = vmatpush1.msra.mxu0 %v36
    %388 = vmatprep.subr.mxu0 0.0
    %389 = vmatpush1.msra.mxu0 %v35
    %390 = vmatprep.subr.mxu0 0.0
    %391 = vmatpush1.msra.mxu0 %v34
    %392 = vmatprep.subr.mxu0 0.0
    %393 = vmatpush1.msra.mxu0 %v33
    %394 = vmatprep.subr.mxu0 0.0
    %395 = vmatpush2.msra.mxu0 0.0
    %396 = vmatprep.subr.mxu0 0.0
    %397 = vmatpush2.msra.mxu0 0.0
    %398 = vmatprep.subr.mxu0 0.0
    %399 = vmatpush2.msra.mxu0 0.0
    %400 = vmatprep.subr.mxu0 0.0
    %401 = vmatpush2.msra.mxu0 0.0
    %402 = vmatprep.subr.mxu0 0.0
    %403 = vmatpush2.msra.mxu0 0.0
    %404 = vmatprep.subr.mxu0 0.0
    %405 = vmatpush2.msra.mxu0 0.0
    %406 = vmatprep.subr.mxu0 0.0
    %407 = vmatpush2.msra.mxu0 0.0
    %408 = vmatprep.subr.mxu0 0.0
    %409 = vmatpush2.msra.mxu0 0.0
    %410 = vmatprep.subr.mxu0 0.0
    %411 = vmatpush2.msra.mxu0 0.0
    %412 = vmatprep.subr.mxu0 0.0
    %413 = vmatpush2.msra.mxu0 0.0
    %414 = vmatprep.subr.mxu0 0.0
    %415 = vmatpush2.msra.mxu0 0.0
    %416 = vmatprep.subr.mxu0 0.0
    %417 = vmatpush2.msra.mxu0 0.0
    %418 = vmatprep.subr.mxu0 0.0
    %419 = vmatpush2.msra.mxu0 0.0
    %420 = vmatprep.subr.mxu0 0.0
    %421 = vmatpush2.msra.mxu0 0.0
    %422 = vmatprep.subr.mxu0 0.0
    %423 = vmatpush2.msra.mxu0 0.0
    %424 = vmatprep.subr.mxu0 0.0
    %425 = vmatpush2.msra.mxu0 0.0
    %426 = vmatprep.mubr.f32.mxu0 0.0
    %427 = vmatmul.mubr.f32.gmra.mxu0 %v123
    %v428 = vpop.f32.mrf.mxu0
    %v429 = vadd.f32 0.0, %v428
    %v430 = vpop.f32.mrf.mxu0
    %431 = vmatprep.mubr.f32.mxu0 0.0
    %432 = vmatmul.mubr.f32.gmra.mxu0 %v126
    %v433 = vpop.f32.mrf.mxu0
    %v434 = vadd.f32 0.0, %v433
    %v435 = vpop.f32.mrf.mxu0
    %436 = vmatprep.mubr.f32.mxu0 0.0
    %437 = vmatmul.mubr.f32.gmra.mxu0 %v129
    %v438 = vpop.f32.mrf.mxu0
    %v439 = vadd.f32 0.0, %v438
    %v440 = vpop.f32.mrf.mxu0
    %441 = vmatprep.mubr.f32.mxu0 0.0
    %442 = vmatmul.mubr.f32.gmra.mxu0 %v132
    %v443 = vpop.f32.mrf.mxu0
    %v444 = vadd.f32 0.0, %v443
    %v445 = vpop.f32.mrf.mxu0
    %446 = vmatprep.mubr.f32.mxu0 0.0
    %447 = vmatmul.mubr.f32.gmra.mxu0 %v135
    %v448 = vpop.f32.mrf.mxu0
    %v449 = vadd.f32 0.0, %v448
    %v450 = vpop.f32.mrf.mxu0
    %451 = vmatprep.mubr.f32.mxu0 0.0
    %452 = vmatmul.mubr.f32.gmra.mxu0 %v138
    %v453 = vpop.f32.mrf.mxu0
    %v454 = vadd.f32 0.0, %v453
    %v455 = vpop.f32.mrf.mxu0
    %456 = vmatprep.mubr.f32.mxu0 0.0
    %457 = vmatmul.mubr.f32.gmra.mxu0 %v141
    %v458 = vpop.f32.mrf.mxu0
    %v459 = vadd.f32 0.0, %v458
    %v460 = vpop.f32.mrf.mxu0
    %461 = vmatprep.mubr.f32.mxu0 0.0
    %462 = vmatmul.mubr.f32.gmra.mxu0 %v144
    %v463 = vpop.f32.mrf.mxu0
    %v464 = vadd.f32 0.0, %v463
    %v465 = vpop.f32.mrf.mxu0
    %466 = vmatprep.mubr.f32.mxu0 0.0
    %467 = vmatmul.mubr.f32.gmra.mxu0 %v147
    %v468 = vpop.f32.mrf.mxu0
    %v469 = vadd.f32 0.0, %v468
    %v470 = vpop.f32.mrf.mxu0
    %471 = vmatprep.mubr.f32.mxu0 0.0
    %472 = vmatmul.mubr.f32.gmra.mxu0 %v150
    %v473 = vpop.f32.mrf.mxu0
    %v474 = vadd.f32 0.0, %v473
    %v475 = vpop.f32.mrf.mxu0
    %476 = vmatprep.mubr.f32.mxu0 0.0
    %477 = vmatmul.mubr.f32.gmra.mxu0 %v153
    %v478 = vpop.f32.mrf.mxu0
    %v479 = vadd.f32 0.0, %v478
    %v480 = vpop.f32.mrf.mxu0
    %481 = vmatprep.mubr.f32.mxu0 0.0
    %482 = vmatmul.mubr.f32.gmra.mxu0 %v156
    %v483 = vpop.f32.mrf.mxu0
    %v484 = vadd.f32 0.0, %v483
    %v485 = vpop.f32.mrf.mxu0
    %486 = vmatprep.mubr.f32.mxu0 0.0
    %487 = vmatmul.mubr.f32.gmra.mxu0 %v159
    %v488 = vpop.f32.mrf.mxu0
    %v489 = vadd.f32 0.0, %v488
    %v490 = vpop.f32.mrf.mxu0
    %491 = vmatprep.mubr.f32.mxu0 0.0
    %492 = vmatmul.mubr.f32.gmra.mxu0 %v162
    %v493 = vpop.f32.mrf.mxu0
    %v494 = vadd.f32 0.0, %v493
    %v495 = vpop.f32.mrf.mxu0
    %496 = vmatprep.mubr.f32.mxu0 0.0
    %497 = vmatmul.mubr.f32.gmra.mxu0 %v165
    %v498 = vpop.f32.mrf.mxu0
    %v499 = vadd.f32 0.0, %v498
    %v500 = vpop.f32.mrf.mxu0
    %501 = vmatprep.mubr.f32.mxu0 0.0
    %502 = vmatmul.mubr.f32.gmra.mxu0 %v168
    %v503 = vpop.f32.mrf.mxu0
    %v504 = vadd.f32 0.0, %v503
    %v505 = vpop.f32.mrf.mxu0
    %506 = vmatprep.mubr.f32.mxu0 0.0
    %507 = vmatmul.mubr.f32.gmra.mxu0 %v171
    %v508 = vpop.f32.mrf.mxu0
    %v509 = vadd.f32 0.0, %v508
    %v510 = vpop.f32.mrf.mxu0
    %511 = vmatprep.mubr.f32.mxu0 0.0
    %512 = vmatmul.mubr.f32.gmra.mxu0 %v174
    %v513 = vpop.f32.mrf.mxu0
    %v514 = vadd.f32 0.0, %v513
    %v515 = vpop.f32.mrf.mxu0
    %516 = vmatprep.mubr.f32.mxu0 0.0
    %517 = vmatmul.mubr.f32.gmra.mxu0 %v177
    %v518 = vpop.f32.mrf.mxu0
    %v519 = vadd.f32 0.0, %v518
    %v520 = vpop.f32.mrf.mxu0
    %521 = vmatprep.mubr.f32.mxu0 0.0
    %522 = vmatmul.mubr.f32.gmra.mxu0 %v180
    %v523 = vpop.f32.mrf.mxu0
    %v524 = vadd.f32 0.0, %v523
    %v525 = vpop.f32.mrf.mxu0
    %526 = vmatprep.mubr.f32.mxu0 0.0
    %527 = vmatmul.mubr.f32.gmra.mxu0 %v183
    %v528 = vpop.f32.mrf.mxu0
    %v529 = vadd.f32 0.0, %v528
    %v530 = vpop.f32.mrf.mxu0
    %531 = vmatprep.mubr.f32.mxu0 0.0
    %532 = vmatmul.mubr.f32.gmra.mxu0 %v186
    %v533 = vpop.f32.mrf.mxu0
    %v534 = vadd.f32 0.0, %v533
    %v535 = vpop.f32.mrf.mxu0
    %536 = vmatprep.mubr.f32.mxu0 0.0
    %537 = vmatmul.mubr.f32.gmra.mxu0 %v189
    %v538 = vpop.f32.mrf.mxu0
    %v539 = vadd.f32 0.0, %v538
    %v540 = vpop.f32.mrf.mxu0
    %541 = vmatprep.mubr.f32.mxu0 0.0
    %542 = vmatmul.mubr.f32.gmra.mxu0 %v192
    %v543 = vpop.f32.mrf.mxu0
    %v544 = vadd.f32 0.0, %v543
    %v545 = vpop.f32.mrf.mxu0
    %546 = vmatprep.mubr.f32.mxu0 0.0
    %547 = vmatmul.mubr.f32.gmra.mxu0 %v195
    %v548 = vpop.f32.mrf.mxu0
    %v549 = vadd.f32 0.0, %v548
    %v550 = vpop.f32.mrf.mxu0
    %551 = vmatprep.mubr.f32.mxu0 0.0
    %552 = vmatmul.mubr.f32.gmra.mxu0 %v198
    %v553 = vpop.f32.mrf.mxu0
    %v554 = vadd.f32 0.0, %v553
    %v555 = vpop.f32.mrf.mxu0
    %556 = vmatprep.mubr.f32.mxu0 0.0
    %557 = vmatmul.mubr.f32.gmra.mxu0 %v201
    %v558 = vpop.f32.mrf.mxu0
    %v559 = vadd.f32 0.0, %v558
    %v560 = vpop.f32.mrf.mxu0
    %561 = vmatprep.mubr.f32.mxu0 0.0
    %562 = vmatmul.mubr.f32.gmra.mxu0 %v204
    %v563 = vpop.f32.mrf.mxu0
    %v564 = vadd.f32 0.0, %v563
    %v565 = vpop.f32.mrf.mxu0
    %566 = vmatprep.mubr.f32.mxu0 0.0
    %567 = vmatmul.mubr.f32.gmra.mxu0 %v207
    %v568 = vpop.f32.mrf.mxu0
    %v569 = vadd.f32 0.0, %v568
    %v570 = vpop.f32.mrf.mxu0
    %571 = vmatprep.mubr.f32.mxu0 0.0
    %572 = vmatmul.mubr.f32.gmra.mxu0 %v210
    %v573 = vpop.f32.mrf.mxu0
    %v574 = vadd.f32 0.0, %v573
    %v575 = vpop.f32.mrf.mxu0
    %576 = vmatprep.mubr.f32.mxu0 0.0
    %577 = vmatmul.mubr.f32.gmra.mxu0 %v213
    %v578 = vpop.f32.mrf.mxu0
    %v579 = vadd.f32 0.0, %v578
    %v580 = vpop.f32.mrf.mxu0
    %581 = vmatprep.mubr.f32.mxu0 0.0
    %582 = vmatmul.mubr.f32.gmra.mxu0 %v216
    %v583 = vpop.f32.mrf.mxu0
    %v584 = vadd.f32 0.0, %v583
    %v585 = vpop.f32.mrf.mxu0
    %586 = vmatprep.mubr.f32.mxu0 0.0
    %587 = vmatmul.mubr.f32.gmra.mxu0 %v219
    %v588 = vpop.f32.mrf.mxu0
    %v589 = vadd.f32 0.0, %v588
    %v590 = vpop.f32.mrf.mxu0
    %591 = vmatprep.mubr.f32.mxu0 0.0
    %592 = vmatmul.mubr.f32.gmra.mxu0 %v222
    %v593 = vpop.f32.mrf.mxu0
    %v594 = vadd.f32 0.0, %v593
    %v595 = vpop.f32.mrf.mxu0
    %596 = vmatprep.mubr.f32.mxu0 0.0
    %597 = vmatmul.mubr.f32.gmra.mxu0 %v225
    %v598 = vpop.f32.mrf.mxu0
    %v599 = vadd.f32 0.0, %v598
    %v600 = vpop.f32.mrf.mxu0
    %601 = vmatprep.mubr.f32.mxu0 0.0
    %602 = vmatmul.mubr.f32.gmra.mxu0 %v228
    %v603 = vpop.f32.mrf.mxu0
    %v604 = vadd.f32 0.0, %v603
    %v605 = vpop.f32.mrf.mxu0
    %606 = vmatprep.mubr.f32.mxu0 0.0
    %607 = vmatmul.mubr.f32.gmra.mxu0 %v231
    %v608 = vpop.f32.mrf.mxu0
    %v609 = vadd.f32 0.0, %v608
    %v610 = vpop.f32.mrf.mxu0
    %611 = vmatprep.mubr.f32.mxu0 0.0
    %612 = vmatmul.mubr.f32.gmra.mxu0 %v234
    %v613 = vpop.f32.mrf.mxu0
    %v614 = vadd.f32 0.0, %v613
    %v615 = vpop.f32.mrf.mxu0
    %616 = vmatprep.mubr.f32.mxu0 0.0
    %617 = vmatmul.mubr.f32.gmra.mxu0 %v237
    %v618 = vpop.f32.mrf.mxu0
    %v619 = vadd.f32 0.0, %v618
    %v620 = vpop.f32.mrf.mxu0
    %621 = vmatprep.mubr.f32.mxu0 0.0
    %622 = vmatmul.mubr.f32.gmra.mxu0 %v240
    %v623 = vpop.f32.mrf.mxu0
    %v624 = vadd.f32 0.0, %v623
    %v625 = vpop.f32.mrf.mxu0
    %626 = vmatprep.mubr.f32.mxu0 0.0
    %627 = vmatmul.mubr.f32.gmra.mxu0 %v243
    %v628 = vpop.f32.mrf.mxu0
    %v629 = vadd.f32 0.0, %v628
    %v630 = vpop.f32.mrf.mxu0
    %631 = vmatprep.mubr.f32.mxu0 0.0
    %632 = vmatmul.mubr.f32.gmra.mxu0 %v246
    %v633 = vpop.f32.mrf.mxu0
    %v634 = vadd.f32 0.0, %v633
    %v635 = vpop.f32.mrf.mxu0
    %636 = vmatprep.mubr.f32.mxu0 0.0
    %637 = vmatmul.mubr.f32.gmra.mxu0 %v249
    %v638 = vpop.f32.mrf.mxu0
    %v639 = vadd.f32 0.0, %v638
    %v640 = vpop.f32.mrf.mxu0
    %641 = vmatprep.mubr.f32.mxu0 0.0
    %642 = vmatmul.mubr.f32.gmra.mxu0 %v252
    %v643 = vpop.f32.mrf.mxu0
    %v644 = vadd.f32 0.0, %v643
    %v645 = vpop.f32.mrf.mxu0
    %646 = vmatprep.mubr.f32.mxu0 0.0
    %647 = vmatmul.mubr.f32.gmra.mxu0 %v255
    %v648 = vpop.f32.mrf.mxu0
    %v649 = vadd.f32 0.0, %v648
    %v650 = vpop.f32.mrf.mxu0
    %651 = vmatprep.mubr.f32.mxu0 0.0
    %652 = vmatmul.mubr.f32.gmra.mxu0 %v258
    %v653 = vpop.f32.mrf.mxu0
    %v654 = vadd.f32 0.0, %v653
    %v655 = vpop.f32.mrf.mxu0
    %656 = vmatprep.mubr.f32.mxu0 0.0
    %657 = vmatmul.mubr.f32.gmra.mxu0 %v261
    %v658 = vpop.f32.mrf.mxu0
    %v659 = vadd.f32 0.0, %v658
    %v660 = vpop.f32.mrf.mxu0
    %661 = vmatprep.mubr.f32.mxu0 0.0
    %662 = vmatmul.mubr.f32.gmra.mxu0 %v264
    %v663 = vpop.f32.mrf.mxu0
    %v664 = vadd.f32 0.0, %v663
    %v665 = vpop.f32.mrf.mxu0
    %666 = vmatprep.mubr.f32.mxu0 0.0
    %667 = vmatmul.mubr.f32.gmra.mxu0 %v267
    %v668 = vpop.f32.mrf.mxu0
    %v669 = vadd.f32 0.0, %v668
    %v670 = vpop.f32.mrf.mxu0
    %671 = vmatprep.mubr.f32.mxu0 0.0
    %672 = vmatmul.mubr.f32.gmra.mxu0 %v270
    %v673 = vpop.f32.mrf.mxu0
    %v674 = vadd.f32 0.0, %v673
    %v675 = vpop.f32.mrf.mxu0
    %676 = vmatprep.mubr.f32.mxu0 0.0
    %677 = vmatmul.mubr.f32.gmra.mxu0 %v273
    %v678 = vpop.f32.mrf.mxu0
    %v679 = vadd.f32 0.0, %v678
    %v680 = vpop.f32.mrf.mxu0
    %681 = vmatprep.mubr.f32.mxu0 0.0
    %682 = vmatmul.mubr.f32.gmra.mxu0 %v276
    %v683 = vpop.f32.mrf.mxu0
    %v684 = vadd.f32 0.0, %v683
    %v685 = vpop.f32.mrf.mxu0
    %686 = vmatprep.mubr.f32.mxu0 0.0
    %687 = vmatmul.mubr.f32.gmra.mxu0 %v279
    %v688 = vpop.f32.mrf.mxu0
    %v689 = vadd.f32 0.0, %v688
    %v690 = vpop.f32.mrf.mxu0
    %691 = vmatprep.mubr.f32.mxu0 0.0
    %692 = vmatmul.mubr.f32.gmra.mxu0 %v282
    %v693 = vpop.f32.mrf.mxu0
    %v694 = vadd.f32 0.0, %v693
    %v695 = vpop.f32.mrf.mxu0
    %696 = vmatprep.mubr.f32.mxu0 0.0
    %697 = vmatmul.mubr.f32.gmra.mxu0 %v285
    %v698 = vpop.f32.mrf.mxu0
    %v699 = vadd.f32 0.0, %v698
    %v700 = vpop.f32.mrf.mxu0
    %701 = vmatprep.mubr.f32.mxu0 0.0
    %702 = vmatmul.mubr.f32.gmra.mxu0 %v288
    %v703 = vpop.f32.mrf.mxu0
    %v704 = vadd.f32 0.0, %v703
    %v705 = vpop.f32.mrf.mxu0
    %706 = vmatprep.mubr.f32.mxu0 0.0
    %707 = vmatmul.mubr.f32.gmra.mxu0 %v291
    %v708 = vpop.f32.mrf.mxu0
    %v709 = vadd.f32 0.0, %v708
    %v710 = vpop.f32.mrf.mxu0
    %711 = vmatprep.mubr.f32.mxu0 0.0
    %712 = vmatmul.mubr.f32.gmra.mxu0 %v294
    %v713 = vpop.f32.mrf.mxu0
    %v714 = vadd.f32 0.0, %v713
    %v715 = vpop.f32.mrf.mxu0
    %716 = vmatprep.mubr.f32.mxu0 0.0
    %717 = vmatmul.mubr.f32.gmra.mxu0 %v297
    %v718 = vpop.f32.mrf.mxu0
    %v719 = vadd.f32 0.0, %v718
    %v720 = vpop.f32.mrf.mxu0
    %721 = vmatprep.mubr.f32.mxu0 0.0
    %722 = vmatmul.mubr.f32.gmra.mxu0 %v300
    %v723 = vpop.f32.mrf.mxu0
    %v724 = vadd.f32 0.0, %v723
    %v725 = vpop.f32.mrf.mxu0
    %726 = vmatprep.mubr.f32.mxu0 0.0
    %727 = vmatmul.mubr.f32.gmra.mxu0 %v303
    %v728 = vpop.f32.mrf.mxu0
    %v729 = vadd.f32 0.0, %v728
    %v730 = vpop.f32.mrf.mxu0
    %731 = vmatprep.mubr.f32.mxu0 0.0
    %732 = vmatmul.mubr.f32.gmra.mxu0 %v306
    %v733 = vpop.f32.mrf.mxu0
    %v734 = vadd.f32 0.0, %v733
    %v735 = vpop.f32.mrf.mxu0
    %736 = vmatprep.mubr.f32.mxu0 0.0
    %737 = vmatmul.mubr.f32.gmra.mxu0 %v309
    %v738 = vpop.f32.mrf.mxu0
    %v739 = vadd.f32 0.0, %v738
    %v740 = vpop.f32.mrf.mxu0
    %741 = vmatprep.mubr.f32.mxu0 0.0
    %742 = vmatmul.mubr.f32.gmra.mxu0 %v312
    %v743 = vpop.f32.mrf.mxu0
    %v744 = vadd.f32 0.0, %v743
    %v745 = vpop.f32.mrf.mxu0
    %746 = vmatprep.mubr.f32.mxu0 0.0
    %747 = vmatmul.mubr.f32.gmra.mxu0 %v315
    %v748 = vpop.f32.mrf.mxu0
    %v749 = vadd.f32 0.0, %v748
    %v750 = vpop.f32.mrf.mxu0
    %751 = vmatprep.mubr.f32.mxu0 0.0
    %752 = vmatmul.mubr.f32.gmra.mxu0 %v318
    %v753 = vpop.f32.mrf.mxu0
    %v754 = vadd.f32 0.0, %v753
    %v755 = vpop.f32.mrf.mxu0
    %756 = vmatprep.mubr.f32.mxu0 0.0
    %757 = vmatmul.mubr.f32.gmra.mxu0 %v321
    %v758 = vpop.f32.mrf.mxu0
    %v759 = vadd.f32 0.0, %v758
    %v760 = vpop.f32.mrf.mxu0
    %761 = vmatprep.mubr.f32.mxu0 0.0
    %762 = vmatmul.mubr.f32.gmra.mxu0 %v324
    %v763 = vpop.f32.mrf.mxu0
    %v764 = vadd.f32 0.0, %v763
    %v765 = vpop.f32.mrf.mxu0
    %766 = vmatprep.mubr.f32.mxu0 0.0
    %767 = vmatmul.mubr.f32.gmra.mxu0 %v327
    %v768 = vpop.f32.mrf.mxu0
    %v769 = vadd.f32 0.0, %v768
    %v770 = vpop.f32.mrf.mxu0
    %771 = vmatprep.mubr.f32.mxu0 0.0
    %772 = vmatmul.mubr.f32.gmra.mxu0 %v330
    %v773 = vpop.f32.mrf.mxu0
    %v774 = vadd.f32 0.0, %v773
    %v775 = vpop.f32.mrf.mxu0
    %776 = vmatprep.mubr.f32.mxu0 0.0
    %777 = vmatmul.mubr.f32.gmra.mxu0 %v333
    %v778 = vpop.f32.mrf.mxu0
    %v779 = vadd.f32 0.0, %v778
    %v780 = vpop.f32.mrf.mxu0
    %781 = vmatprep.mubr.f32.mxu0 0.0
    %782 = vmatmul.mubr.f32.gmra.mxu0 %v336
    %v783 = vpop.f32.mrf.mxu0
    %v784 = vadd.f32 0.0, %v783
    %v785 = vpop.f32.mrf.mxu0
    %786 = vmatprep.mubr.f32.mxu0 0.0
    %787 = vmatmul.mubr.f32.gmra.mxu0 %v339
    %v788 = vpop.f32.mrf.mxu0
    %v789 = vadd.f32 0.0, %v788
    %v790 = vpop.f32.mrf.mxu0
    %791 = vmatprep.mubr.f32.mxu0 0.0
    %792 = vmatmul.mubr.f32.gmra.mxu0 %v342
    %v793 = vpop.f32.mrf.mxu0
    %v794 = vadd.f32 0.0, %v793
    %v795 = vpop.f32.mrf.mxu0
    %796 = vmatprep.mubr.f32.mxu0 0.0
    %797 = vmatmul.mubr.f32.gmra.mxu0 %v345
    %v798 = vpop.f32.mrf.mxu0
    %v799 = vadd.f32 0.0, %v798
    %v800 = vpop.f32.mrf.mxu0
    %801 = vmatprep.mubr.f32.mxu0 0.0
    %802 = vmatmul.mubr.f32.gmra.mxu0 %v348
    %v803 = vpop.f32.mrf.mxu0
    %v804 = vadd.f32 0.0, %v803
    %v805 = vpop.f32.mrf.mxu0
    %806 = vmatprep.mubr.f32.mxu0 0.0
    %807 = vmatmul.mubr.f32.gmra.mxu0 %v351
    %v808 = vpop.f32.mrf.mxu0
    %v809 = vadd.f32 0.0, %v808
    %v810 = vpop.f32.mrf.mxu0
    %811 = vmatprep.mubr.f32.mxu0 0.0
    %812 = vmatmul.mubr.f32.gmra.mxu0 %v354
    %v813 = vpop.f32.mrf.mxu0
    %v814 = vadd.f32 0.0, %v813
    %v815 = vpop.f32.mrf.mxu0
    %816 = vmatprep.mubr.f32.mxu0 0.0
    %817 = vmatmul.mubr.f32.gmra.mxu0 %v357
    %v818 = vpop.f32.mrf.mxu0
    %v819 = vadd.f32 0.0, %v818
    %v820 = vpop.f32.mrf.mxu0
    %821 = vmatprep.mubr.f32.mxu0 0.0
    %822 = vmatmul.mubr.f32.gmra.mxu0 %v360
    %v823 = vpop.f32.mrf.mxu0
    %v824 = vadd.f32 0.0, %v823
    %v825 = vpop.f32.mrf.mxu0
    %826 = vdwg.mxu0
    %v827 = vld [vmem:[%s7] sm:$0xff]
    %v828 = vld [vmem:[%s7 + $0x8] sm:$0xff]
    %s829 = scalar_lea.vmem %s7, 16
    %v830 = vld [vmem:[%s829] sm:$0xff]
    %v831 = vld [vmem:[%s829 + $0x8] sm:$0xff]
    %vm832 = vcmask 130048
    %v834 = vsel %vm832, %v509, 0
    %v837 = vsel %vm832, %v514, 0
    %v840 = vsel %vm832, %v519, 0
    %v843 = vsel %vm832, %v524, 0
    %v846 = vsel %vm832, %v529, 0
    %v849 = vsel %vm832, %v534, 0
    %v852 = vsel %vm832, %v539, 0
    %v855 = vsel %vm832, %v544, 0
    %v858 = vsel %vm832, %v549, 0
    %v861 = vsel %vm832, %v554, 0
    %v864 = vsel %vm832, %v559, 0
    %v867 = vsel %vm832, %v564, 0
    %v870 = vsel %vm832, %v569, 0
    %v873 = vsel %vm832, %v574, 0
    %v876 = vsel %vm832, %v579, 0
    %v879 = vsel %vm832, %v584, 0
    %881 = vmatprep.subr.mxu0 0.0
    %882 = vmatpush1.msra.mxu0 0.0
    %883 = vmatprep.subr.mxu0 0.0
    %884 = vmatpush1.msra.mxu0 0.0
    %885 = vmatprep.subr.mxu0 0.0
    %886 = vmatpush1.msra.mxu0 0.0
    %887 = vmatprep.subr.mxu0 0.0
    %888 = vmatpush1.msra.mxu0 0.0
    %889 = vmatprep.subr.mxu0 0.0
    %890 = vmatpush1.msra.mxu0 0.0
    %891 = vmatprep.subr.mxu0 0.0
    %892 = vmatpush1.msra.mxu0 0.0
    %893 = vmatprep.subr.mxu0 0.0
    %894 = vmatpush1.msra.mxu0 0.0
    %895 = vmatprep.subr.mxu0 0.0
    %896 = vmatpush1.msra.mxu0 0.0
    %897 = vmatprep.subr.mxu0 0.0
    %898 = vmatpush1.msra.mxu0 0.0
    %899 = vmatprep.subr.mxu0 0.0
    %900 = vmatpush1.msra.mxu0 0.0
    %901 = vmatprep.subr.mxu0 0.0
    %902 = vmatpush1.msra.mxu0 0.0
    %903 = vmatprep.subr.mxu0 0.0
    %904 = vmatpush1.msra.mxu0 0.0
    %905 = vmatprep.subr.mxu0 0.0
    %906 = vmatpush1.msra.mxu0 0.0
    %907 = vmatprep.subr.mxu0 0.0
    %908 = vmatpush1.msra.mxu0 0.0
    %909 = vmatprep.subr.mxu0 0.0
    %910 = vmatpush1.msra.mxu0 %v831
    %911 = vmatprep.subr.mxu0 0.0
    %912 = vmatpush1.msra.mxu0 %v830
    %913 = vmatprep.subr.mxu0 0.0
    %914 = vmatpush2.msra.mxu0 0.0
    %915 = vmatprep.subr.mxu0 0.0
    %916 = vmatpush2.msra.mxu0 0.0
    %917 = vmatprep.subr.mxu0 0.0
    %918 = vmatpush2.msra.mxu0 0.0
    %919 = vmatprep.subr.mxu0 0.0
    %920 = vmatpush2.msra.mxu0 0.0
    %921 = vmatprep.subr.mxu0 0.0
    %922 = vmatpush2.msra.mxu0 0.0
    %923 = vmatprep.subr.mxu0 0.0
    %924 = vmatpush2.msra.mxu0 0.0
    %925 = vmatprep.subr.mxu0 0.0
    %926 = vmatpush2.msra.mxu0 0.0
    %927 = vmatprep.subr.mxu0 0.0
    %928 = vmatpush2.msra.mxu0 0.0
    %929 = vmatprep.subr.mxu0 0.0
    %930 = vmatpush2.msra.mxu0 0.0
    %931 = vmatprep.subr.mxu0 0.0
    %932 = vmatpush2.msra.mxu0 0.0
    %933 = vmatprep.subr.mxu0 0.0
    %934 = vmatpush2.msra.mxu0 0.0
    %935 = vmatprep.subr.mxu0 0.0
    %936 = vmatpush2.msra.mxu0 0.0
    %937 = vmatprep.subr.mxu0 0.0
    %938 = vmatpush2.msra.mxu0 0.0
    %939 = vmatprep.subr.mxu0 0.0
    %940 = vmatpush2.msra.mxu0 0.0
    %941 = vmatprep.subr.mxu0 0.0
    %942 = vmatpush2.msra.mxu0 0.0
    %943 = vmatprep.subr.mxu0 0.0
    %944 = vmatpush2.msra.mxu0 0.0
    %945 = vmatprep.mubr.f32.mxu0 0.0
    %946 = vmatmul.mubr.f32.gmra.mxu0 %v834
    %v947 = vpop.f32.mrf.mxu0
    %v948 = vadd.f32 0.0, %v947
    %v949 = vpop.f32.mrf.mxu0
    %950 = vmatprep.mubr.f32.mxu0 0.0
    %951 = vmatmul.mubr.f32.gmra.mxu0 %v837
    %v952 = vpop.f32.mrf.mxu0
    %v953 = vadd.f32 0.0, %v952
    %v954 = vpop.f32.mrf.mxu0
    %955 = vmatprep.mubr.f32.mxu0 0.0
    %956 = vmatmul.mubr.f32.gmra.mxu0 %v840
    %v957 = vpop.f32.mrf.mxu0
    %v958 = vadd.f32 0.0, %v957
    %v959 = vpop.f32.mrf.mxu0
    %960 = vmatprep.mubr.f32.mxu0 0.0
    %961 = vmatmul.mubr.f32.gmra.mxu0 %v843
    %v962 = vpop.f32.mrf.mxu0
    %v963 = vadd.f32 0.0, %v962
    %v964 = vpop.f32.mrf.mxu0
    %965 = vmatprep.mubr.f32.mxu0 0.0
    %966 = vmatmul.mubr.f32.gmra.mxu0 %v846
    %v967 = vpop.f32.mrf.mxu0
    %v968 = vadd.f32 0.0, %v967
    %v969 = vpop.f32.mrf.mxu0
    %970 = vmatprep.mubr.f32.mxu0 0.0
    %971 = vmatmul.mubr.f32.gmra.mxu0 %v849
    %v972 = vpop.f32.mrf.mxu0
    %v973 = vadd.f32 0.0, %v972
    %v974 = vpop.f32.mrf.mxu0
    %975 = vmatprep.mubr.f32.mxu0 0.0
    %976 = vmatmul.mubr.f32.gmra.mxu0 %v852
    %v977 = vpop.f32.mrf.mxu0
    %v978 = vadd.f32 0.0, %v977
    %v979 = vpop.f32.mrf.mxu0
    %980 = vmatprep.mubr.f32.mxu0 0.0
    %981 = vmatmul.mubr.f32.gmra.mxu0 %v855
    %v982 = vpop.f32.mrf.mxu0
    %v983 = vadd.f32 0.0, %v982
    %v984 = vpop.f32.mrf.mxu0
    %985 = vmatprep.mubr.f32.mxu0 0.0
    %986 = vmatmul.mubr.f32.gmra.mxu0 %v858
    %v987 = vpop.f32.mrf.mxu0
    %v988 = vadd.f32 0.0, %v987
    %v989 = vpop.f32.mrf.mxu0
    %990 = vmatprep.mubr.f32.mxu0 0.0
    %991 = vmatmul.mubr.f32.gmra.mxu0 %v861
    %v992 = vpop.f32.mrf.mxu0
    %v993 = vadd.f32 0.0, %v992
    %v994 = vpop.f32.mrf.mxu0
    %995 = vmatprep.mubr.f32.mxu0 0.0
    %996 = vmatmul.mubr.f32.gmra.mxu0 %v864
    %v997 = vpop.f32.mrf.mxu0
    %v998 = vadd.f32 0.0, %v997
    %v999 = vpop.f32.mrf.mxu0
    %1000 = vmatprep.mubr.f32.mxu0 0.0
    %1001 = vmatmul.mubr.f32.gmra.mxu0 %v867
    %v1002 = vpop.f32.mrf.mxu0
    %v1003 = vadd.f32 0.0, %v1002
    %v1004 = vpop.f32.mrf.mxu0
    %1005 = vmatprep.mubr.f32.mxu0 0.0
    %1006 = vmatmul.mubr.f32.gmra.mxu0 %v870
    %v1007 = vpop.f32.mrf.mxu0
    %v1008 = vadd.f32 0.0, %v1007
    %v1009 = vpop.f32.mrf.mxu0
    %1010 = vmatprep.mubr.f32.mxu0 0.0
    %1011 = vmatmul.mubr.f32.gmra.mxu0 %v873
    %v1012 = vpop.f32.mrf.mxu0
    %v1013 = vadd.f32 0.0, %v1012
    %v1014 = vpop.f32.mrf.mxu0
    %1015 = vmatprep.mubr.f32.mxu0 0.0
    %1016 = vmatmul.mubr.f32.gmra.mxu0 %v876
    %v1017 = vpop.f32.mrf.mxu0
    %v1018 = vadd.f32 0.0, %v1017
    %v1019 = vpop.f32.mrf.mxu0
    %1020 = vmatprep.mubr.f32.mxu0 0.0
    %1021 = vmatmul.mubr.f32.gmra.mxu0 %v879
    %v1022 = vpop.f32.mrf.mxu0
    %v1023 = vadd.f32 0.0, %v1022
    %v1024 = vpop.f32.mrf.mxu0
    %1025 = vdwg.mxu0
    %v1027 = vsel %vm832, %v429, 0
    %v1030 = vsel %vm832, %v434, 0
    %v1033 = vsel %vm832, %v439, 0
    %v1036 = vsel %vm832, %v444, 0
    %v1039 = vsel %vm832, %v449, 0
    %v1042 = vsel %vm832, %v454, 0
    %v1045 = vsel %vm832, %v459, 0
    %v1048 = vsel %vm832, %v464, 0
    %v1051 = vsel %vm832, %v469, 0
    %v1054 = vsel %vm832, %v474, 0
    %v1057 = vsel %vm832, %v479, 0
    %v1060 = vsel %vm832, %v484, 0
    %v1063 = vsel %vm832, %v489, 0
    %v1066 = vsel %vm832, %v494, 0
    %v1069 = vsel %vm832, %v499, 0
    %v1072 = vsel %vm832, %v504, 0
    %1074 = vmatprep.subr.mxu0 0.0
    %1075 = vmatpush1.msra.mxu0 0.0
    %1076 = vmatprep.subr.mxu0 0.0
    %1077 = vmatpush1.msra.mxu0 0.0
    %1078 = vmatprep.subr.mxu0 0.0
    %1079 = vmatpush1.msra.mxu0 0.0
    %1080 = vmatprep.subr.mxu0 0.0
    %1081 = vmatpush1.msra.mxu0 0.0
    %1082 = vmatprep.subr.mxu0 0.0
    %1083 = vmatpush1.msra.mxu0 0.0
    %1084 = vmatprep.subr.mxu0 0.0
    %1085 = vmatpush1.msra.mxu0 0.0
    %1086 = vmatprep.subr.mxu0 0.0
    %1087 = vmatpush1.msra.mxu0 0.0
    %1088 = vmatprep.subr.mxu0 0.0
    %1089 = vmatpush1.msra.mxu0 0.0
    %1090 = vmatprep.subr.mxu0 0.0
    %1091 = vmatpush1.msra.mxu0 0.0
    %1092 = vmatprep.subr.mxu0 0.0
    %1093 = vmatpush1.msra.mxu0 0.0
    %1094 = vmatprep.subr.mxu0 0.0
    %1095 = vmatpush1.msra.mxu0 0.0
    %1096 = vmatprep.subr.mxu0 0.0
    %1097 = vmatpush1.msra.mxu0 0.0
    %1098 = vmatprep.subr.mxu0 0.0
    %1099 = vmatpush1.msra.mxu0 0.0
    %1100 = vmatprep.subr.mxu0 0.0
    %1101 = vmatpush1.msra.mxu0 0.0
    %1102 = vmatprep.subr.mxu0 0.0
    %1103 = vmatpush1.msra.mxu0 %v828
    %1104 = vmatprep.subr.mxu0 0.0
    %1105 = vmatpush1.msra.mxu0 %v827
    %1106 = vmatprep.subr.mxu0 0.0
    %1107 = vmatpush2.msra.mxu0 0.0
    %1108 = vmatprep.subr.mxu0 0.0
    %1109 = vmatpush2.msra.mxu0 0.0
    %1110 = vmatprep.subr.mxu0 0.0
    %1111 = vmatpush2.msra.mxu0 0.0
    %1112 = vmatprep.subr.mxu0 0.0
    %1113 = vmatpush2.msra.mxu0 0.0
    %1114 = vmatprep.subr.mxu0 0.0
    %1115 = vmatpush2.msra.mxu0 0.0
    %1116 = vmatprep.subr.mxu0 0.0
    %1117 = vmatpush2.msra.mxu0 0.0
    %1118 = vmatprep.subr.mxu0 0.0
    %1119 = vmatpush2.msra.mxu0 0.0
    %1120 = vmatprep.subr.mxu0 0.0
    %1121 = vmatpush2.msra.mxu0 0.0
    %1122 = vmatprep.subr.mxu0 0.0
    %1123 = vmatpush2.msra.mxu0 0.0
    %1124 = vmatprep.subr.mxu0 0.0
    %1125 = vmatpush2.msra.mxu0 0.0
    %1126 = vmatprep.subr.mxu0 0.0
    %1127 = vmatpush2.msra.mxu0 0.0
    %1128 = vmatprep.subr.mxu0 0.0
    %1129 = vmatpush2.msra.mxu0 0.0
    %1130 = vmatprep.subr.mxu0 0.0
    %1131 = vmatpush2.msra.mxu0 0.0
    %1132 = vmatprep.subr.mxu0 0.0
    %1133 = vmatpush2.msra.mxu0 0.0
    %1134 = vmatprep.subr.mxu0 0.0
    %1135 = vmatpush2.msra.mxu0 0.0
    %1136 = vmatprep.subr.mxu0 0.0
    %1137 = vmatpush2.msra.mxu0 0.0
    %1138 = vmatprep.mubr.f32.mxu0 0.0
    %1139 = vmatmul.mubr.f32.gmra.mxu0 %v1027
    %v1140 = vpop.f32.mrf.mxu0
    %v1141 = vadd.f32 %v948, %v1140
    %v1142 = vpop.f32.mrf.mxu0
    %1143 = vmatprep.mubr.f32.mxu0 0.0
    %1144 = vmatmul.mubr.f32.gmra.mxu0 %v1030
    %v1145 = vpop.f32.mrf.mxu0
    %v1146 = vadd.f32 %v953, %v1145
    %v1147 = vpop.f32.mrf.mxu0
    %1148 = vmatprep.mubr.f32.mxu0 0.0
    %1149 = vmatmul.mubr.f32.gmra.mxu0 %v1033
    %v1150 = vpop.f32.mrf.mxu0
    %v1151 = vadd.f32 %v958, %v1150
    %v1152 = vpop.f32.mrf.mxu0
    %1153 = vmatprep.mubr.f32.mxu0 0.0
    %1154 = vmatmul.mubr.f32.gmra.mxu0 %v1036
    %v1155 = vpop.f32.mrf.mxu0
    %v1156 = vadd.f32 %v963, %v1155
    %v1157 = vpop.f32.mrf.mxu0
    %1158 = vmatprep.mubr.f32.mxu0 0.0
    %1159 = vmatmul.mubr.f32.gmra.mxu0 %v1039
    %v1160 = vpop.f32.mrf.mxu0
    %v1161 = vadd.f32 %v968, %v1160
    %v1162 = vpop.f32.mrf.mxu0
    %1163 = vmatprep.mubr.f32.mxu0 0.0
    %1164 = vmatmul.mubr.f32.gmra.mxu0 %v1042
    %v1165 = vpop.f32.mrf.mxu0
    %v1166 = vadd.f32 %v973, %v1165
    %v1167 = vpop.f32.mrf.mxu0
    %1168 = vmatprep.mubr.f32.mxu0 0.0
    %1169 = vmatmul.mubr.f32.gmra.mxu0 %v1045
    %v1170 = vpop.f32.mrf.mxu0
    %v1171 = vadd.f32 %v978, %v1170
    %v1172 = vpop.f32.mrf.mxu0
    %1173 = vmatprep.mubr.f32.mxu0 0.0
    %1174 = vmatmul.mubr.f32.gmra.mxu0 %v1048
    %v1175 = vpop.f32.mrf.mxu0
    %v1176 = vadd.f32 %v983, %v1175
    %v1177 = vpop.f32.mrf.mxu0
    %1178 = vmatprep.mubr.f32.mxu0 0.0
    %1179 = vmatmul.mubr.f32.gmra.mxu0 %v1051
    %v1180 = vpop.f32.mrf.mxu0
    %v1181 = vadd.f32 %v988, %v1180
    %v1182 = vpop.f32.mrf.mxu0
    %1183 = vmatprep.mubr.f32.mxu0 0.0
    %1184 = vmatmul.mubr.f32.gmra.mxu0 %v1054
    %v1185 = vpop.f32.mrf.mxu0
    %v1186 = vadd.f32 %v993, %v1185
    %v1187 = vpop.f32.mrf.mxu0
    %1188 = vmatprep.mubr.f32.mxu0 0.0
    %1189 = vmatmul.mubr.f32.gmra.mxu0 %v1057
    %v1190 = vpop.f32.mrf.mxu0
    %v1191 = vadd.f32 %v998, %v1190
    %v1192 = vpop.f32.mrf.mxu0
    %1193 = vmatprep.mubr.f32.mxu0 0.0
    %1194 = vmatmul.mubr.f32.gmra.mxu0 %v1060
    %v1195 = vpop.f32.mrf.mxu0
    %v1196 = vadd.f32 %v1003, %v1195
    %v1197 = vpop.f32.mrf.mxu0
    %1198 = vmatprep.mubr.f32.mxu0 0.0
    %1199 = vmatmul.mubr.f32.gmra.mxu0 %v1063
    %v1200 = vpop.f32.mrf.mxu0
    %v1201 = vadd.f32 %v1008, %v1200
    %v1202 = vpop.f32.mrf.mxu0
    %1203 = vmatprep.mubr.f32.mxu0 0.0
    %1204 = vmatmul.mubr.f32.gmra.mxu0 %v1066
    %v1205 = vpop.f32.mrf.mxu0
    %v1206 = vadd.f32 %v1013, %v1205
    %v1207 = vpop.f32.mrf.mxu0
    %1208 = vmatprep.mubr.f32.mxu0 0.0
    %1209 = vmatmul.mubr.f32.gmra.mxu0 %v1069
    %v1210 = vpop.f32.mrf.mxu0
    %v1211 = vadd.f32 %v1018, %v1210
    %v1212 = vpop.f32.mrf.mxu0
    %1213 = vmatprep.mubr.f32.mxu0 0.0
    %1214 = vmatmul.mubr.f32.gmra.mxu0 %v1072
    %v1215 = vpop.f32.mrf.mxu0
    %v1216 = vadd.f32 %v1023, %v1215
    %v1217 = vpop.f32.mrf.mxu0
    %1218 = vdwg.mxu0
    %s1219 = scalar_lea.vmem %s7, 32
    %v1220 = vld [vmem:[%s1219] sm:$0xff]
    %v1221 = vld [vmem:[%s1219 + $0x8] sm:$0xff]
    %v1223 = vsel %vm832, %v589, 0
    %v1226 = vsel %vm832, %v594, 0
    %v1229 = vsel %vm832, %v599, 0
    %v1232 = vsel %vm832, %v604, 0
    %v1235 = vsel %vm832, %v609, 0
    %v1238 = vsel %vm832, %v614, 0
    %v1241 = vsel %vm832, %v619, 0
    %v1244 = vsel %vm832, %v624, 0
    %v1247 = vsel %vm832, %v629, 0
    %v1250 = vsel %vm832, %v634, 0
    %v1253 = vsel %vm832, %v639, 0
    %v1256 = vsel %vm832, %v644, 0
    %v1259 = vsel %vm832, %v649, 0
    %v1262 = vsel %vm832, %v654, 0
    %v1265 = vsel %vm832, %v659, 0
    %v1268 = vsel %vm832, %v664, 0
    %1270 = vmatprep.subr.mxu0 0.0
    %1271 = vmatpush1.msra.mxu0 0.0
    %1272 = vmatprep.subr.mxu0 0.0
    %1273 = vmatpush1.msra.mxu0 0.0
    %1274 = vmatprep.subr.mxu0 0.0
    %1275 = vmatpush1.msra.mxu0 0.0
    %1276 = vmatprep.subr.mxu0 0.0
    %1277 = vmatpush1.msra.mxu0 0.0
    %1278 = vmatprep.subr.mxu0 0.0
    %1279 = vmatpush1.msra.mxu0 0.0
    %1280 = vmatprep.subr.mxu0 0.0
    %1281 = vmatpush1.msra.mxu0 0.0
    %1282 = vmatprep.subr.mxu0 0.0
    %1283 = vmatpush1.msra.mxu0 0.0
    %1284 = vmatprep.subr.mxu0 0.0
    %1285 = vmatpush1.msra.mxu0 0.0
    %1286 = vmatprep.subr.mxu0 0.0
    %1287 = vmatpush1.msra.mxu0 0.0
    %1288 = vmatprep.subr.mxu0 0.0
    %1289 = vmatpush1.msra.mxu0 0.0
    %1290 = vmatprep.subr.mxu0 0.0
    %1291 = vmatpush1.msra.mxu0 0.0
    %1292 = vmatprep.subr.mxu0 0.0
    %1293 = vmatpush1.msra.mxu0 0.0
    %1294 = vmatprep.subr.mxu0 0.0
    %1295 = vmatpush1.msra.mxu0 0.0
    %1296 = vmatprep.subr.mxu0 0.0
    %1297 = vmatpush1.msra.mxu0 0.0
    %1298 = vmatprep.subr.mxu0 0.0
    %1299 = vmatpush1.msra.mxu0 %v1221
    %1300 = vmatprep.subr.mxu0 0.0
    %1301 = vmatpush1.msra.mxu0 %v1220
    %1302 = vmatprep.subr.mxu0 0.0
    %1303 = vmatpush2.msra.mxu0 0.0
    %1304 = vmatprep.subr.mxu0 0.0
    %1305 = vmatpush2.msra.mxu0 0.0
    %1306 = vmatprep.subr.mxu0 0.0
    %1307 = vmatpush2.msra.mxu0 0.0
    %1308 = vmatprep.subr.mxu0 0.0
    %1309 = vmatpush2.msra.mxu0 0.0
    %1310 = vmatprep.subr.mxu0 0.0
    %1311 = vmatpush2.msra.mxu0 0.0
    %1312 = vmatprep.subr.mxu0 0.0
    %1313 = vmatpush2.msra.mxu0 0.0
    %1314 = vmatprep.subr.mxu0 0.0
    %1315 = vmatpush2.msra.mxu0 0.0
    %1316 = vmatprep.subr.mxu0 0.0
    %1317 = vmatpush2.msra.mxu0 0.0
    %1318 = vmatprep.subr.mxu0 0.0
    %1319 = vmatpush2.msra.mxu0 0.0
    %1320 = vmatprep.subr.mxu0 0.0
    %1321 = vmatpush2.msra.mxu0 0.0
    %1322 = vmatprep.subr.mxu0 0.0
    %1323 = vmatpush2.msra.mxu0 0.0
    %1324 = vmatprep.subr.mxu0 0.0
    %1325 = vmatpush2.msra.mxu0 0.0
    %1326 = vmatprep.subr.mxu0 0.0
    %1327 = vmatpush2.msra.mxu0 0.0
    %1328 = vmatprep.subr.mxu0 0.0
    %1329 = vmatpush2.msra.mxu0 0.0
    %1330 = vmatprep.subr.mxu0 0.0
    %1331 = vmatpush2.msra.mxu0 0.0
    %1332 = vmatprep.subr.mxu0 0.0
    %1333 = vmatpush2.msra.mxu0 0.0
    %1334 = vmatprep.mubr.f32.mxu0 0.0
    %1335 = vmatmul.mubr.f32.gmra.mxu0 %v1223
    %v1336 = vpop.f32.mrf.mxu0
    %v1337 = vadd.f32 0.0, %v1336
    %v1338 = vpop.f32.mrf.mxu0
    %1339 = vmatprep.mubr.f32.mxu0 0.0
    %1340 = vmatmul.mubr.f32.gmra.mxu0 %v1226
    %v1341 = vpop.f32.mrf.mxu0
    %v1342 = vadd.f32 0.0, %v1341
    %v1343 = vpop.f32.mrf.mxu0
    %1344 = vmatprep.mubr.f32.mxu0 0.0
    %1345 = vmatmul.mubr.f32.gmra.mxu0 %v1229
    %v1346 = vpop.f32.mrf.mxu0
    %v1347 = vadd.f32 0.0, %v1346
    %v1348 = vpop.f32.mrf.mxu0
    %1349 = vmatprep.mubr.f32.mxu0 0.0
    %1350 = vmatmul.mubr.f32.gmra.mxu0 %v1232
    %v1351 = vpop.f32.mrf.mxu0
    %v1352 = vadd.f32 0.0, %v1351
    %v1353 = vpop.f32.mrf.mxu0
    %1354 = vmatprep.mubr.f32.mxu0 0.0
    %1355 = vmatmul.mubr.f32.gmra.mxu0 %v1235
    %v1356 = vpop.f32.mrf.mxu0
    %v1357 = vadd.f32 0.0, %v1356
    %v1358 = vpop.f32.mrf.mxu0
    %1359 = vmatprep.mubr.f32.mxu0 0.0
    %1360 = vmatmul.mubr.f32.gmra.mxu0 %v1238
    %v1361 = vpop.f32.mrf.mxu0
    %v1362 = vadd.f32 0.0, %v1361
    %v1363 = vpop.f32.mrf.mxu0
    %1364 = vmatprep.mubr.f32.mxu0 0.0
    %1365 = vmatmul.mubr.f32.gmra.mxu0 %v1241
    %v1366 = vpop.f32.mrf.mxu0
    %v1367 = vadd.f32 0.0, %v1366
    %v1368 = vpop.f32.mrf.mxu0
    %1369 = vmatprep.mubr.f32.mxu0 0.0
    %1370 = vmatmul.mubr.f32.gmra.mxu0 %v1244
    %v1371 = vpop.f32.mrf.mxu0
    %v1372 = vadd.f32 0.0, %v1371
    %v1373 = vpop.f32.mrf.mxu0
    %1374 = vmatprep.mubr.f32.mxu0 0.0
    %1375 = vmatmul.mubr.f32.gmra.mxu0 %v1247
    %v1376 = vpop.f32.mrf.mxu0
    %v1377 = vadd.f32 0.0, %v1376
    %v1378 = vpop.f32.mrf.mxu0
    %1379 = vmatprep.mubr.f32.mxu0 0.0
    %1380 = vmatmul.mubr.f32.gmra.mxu0 %v1250
    %v1381 = vpop.f32.mrf.mxu0
    %v1382 = vadd.f32 0.0, %v1381
    %v1383 = vpop.f32.mrf.mxu0
    %1384 = vmatprep.mubr.f32.mxu0 0.0
    %1385 = vmatmul.mubr.f32.gmra.mxu0 %v1253
    %v1386 = vpop.f32.mrf.mxu0
    %v1387 = vadd.f32 0.0, %v1386
    %v1388 = vpop.f32.mrf.mxu0
    %1389 = vmatprep.mubr.f32.mxu0 0.0
    %1390 = vmatmul.mubr.f32.gmra.mxu0 %v1256
    %v1391 = vpop.f32.mrf.mxu0
    %v1392 = vadd.f32 0.0, %v1391
    %v1393 = vpop.f32.mrf.mxu0
    %1394 = vmatprep.mubr.f32.mxu0 0.0
    %1395 = vmatmul.mubr.f32.gmra.mxu0 %v1259
    %v1396 = vpop.f32.mrf.mxu0
    %v1397 = vadd.f32 0.0, %v1396
    %v1398 = vpop.f32.mrf.mxu0
    %1399 = vmatprep.mubr.f32.mxu0 0.0
    %1400 = vmatmul.mubr.f32.gmra.mxu0 %v1262
    %v1401 = vpop.f32.mrf.mxu0
    %v1402 = vadd.f32 0.0, %v1401
    %v1403 = vpop.f32.mrf.mxu0
    %1404 = vmatprep.mubr.f32.mxu0 0.0
    %1405 = vmatmul.mubr.f32.gmra.mxu0 %v1265
    %v1406 = vpop.f32.mrf.mxu0
    %v1407 = vadd.f32 0.0, %v1406
    %v1408 = vpop.f32.mrf.mxu0
    %1409 = vmatprep.mubr.f32.mxu0 0.0
    %1410 = vmatmul.mubr.f32.gmra.mxu0 %v1268
    %v1411 = vpop.f32.mrf.mxu0
    %v1412 = vadd.f32 0.0, %v1411
    %v1413 = vpop.f32.mrf.mxu0
    %1414 = vdwg.mxu0
    %v1415 = vadd.f32 %v1141, %v1337
    %v1416 = vadd.f32 %v1146, %v1342
    %v1417 = vadd.f32 %v1151, %v1347
    %v1418 = vadd.f32 %v1156, %v1352
    %v1419 = vadd.f32 %v1161, %v1357
    %v1420 = vadd.f32 %v1166, %v1362
    %v1421 = vadd.f32 %v1171, %v1367
    %v1422 = vadd.f32 %v1176, %v1372
    %v1423 = vadd.f32 %v1181, %v1377
    %v1424 = vadd.f32 %v1186, %v1382
    %v1425 = vadd.f32 %v1191, %v1387
    %v1426 = vadd.f32 %v1196, %v1392
    %v1427 = vadd.f32 %v1201, %v1397
    %v1428 = vadd.f32 %v1206, %v1402
    %v1429 = vadd.f32 %v1211, %v1407
    %v1430 = vadd.f32 %v1216, %v1412
    %s1431 = scalar_lea.vmem %s7, 48
    %v1432 = vld [vmem:[%s1431] sm:$0xff]
    %v1433 = vld [vmem:[%s1431 + $0x8] sm:$0xff]
    %v1435 = vsel %vm832, %v669, 0
    %v1438 = vsel %vm832, %v674, 0
    %v1441 = vsel %vm832, %v679, 0
    %v1444 = vsel %vm832, %v684, 0
    %v1447 = vsel %vm832, %v689, 0
    %v1450 = vsel %vm832, %v694, 0
    %v1453 = vsel %vm832, %v699, 0
    %v1456 = vsel %vm832, %v704, 0
    %v1459 = vsel %vm832, %v709, 0
    %v1462 = vsel %vm832, %v714, 0
    %v1465 = vsel %vm832, %v719, 0
    %v1468 = vsel %vm832, %v724, 0
    %v1471 = vsel %vm832, %v729, 0
    %v1474 = vsel %vm832, %v734, 0
    %v1477 = vsel %vm832, %v739, 0
    %v1480 = vsel %vm832, %v744, 0
    %1482 = vmatprep.subr.mxu0 0.0
    %1483 = vmatpush1.msra.mxu0 0.0
    %1484 = vmatprep.subr.mxu0 0.0
    %1485 = vmatpush1.msra.mxu0 0.0
    %1486 = vmatprep.subr.mxu0 0.0
    %1487 = vmatpush1.msra.mxu0 0.0
    %1488 = vmatprep.subr.mxu0 0.0
    %1489 = vmatpush1.msra.mxu0 0.0
    %1490 = vmatprep.subr.mxu0 0.0
    %1491 = vmatpush1.msra.mxu0 0.0
    %1492 = vmatprep.subr.mxu0 0.0
    %1493 = vmatpush1.msra.mxu0 0.0
    %1494 = vmatprep.subr.mxu0 0.0
    %1495 = vmatpush1.msra.mxu0 0.0
    %1496 = vmatprep.subr.mxu0 0.0
    %1497 = vmatpush1.msra.mxu0 0.0
    %1498 = vmatprep.subr.mxu0 0.0
    %1499 = vmatpush1.msra.mxu0 0.0
    %1500 = vmatprep.subr.mxu0 0.0
    %1501 = vmatpush1.msra.mxu0 0.0
    %1502 = vmatprep.subr.mxu0 0.0
    %1503 = vmatpush1.msra.mxu0 0.0
    %1504 = vmatprep.subr.mxu0 0.0
    %1505 = vmatpush1.msra.mxu0 0.0
    %1506 = vmatprep.subr.mxu0 0.0
    %1507 = vmatpush1.msra.mxu0 0.0
    %1508 = vmatprep.subr.mxu0 0.0
    %1509 = vmatpush1.msra.mxu0 0.0
    %1510 = vmatprep.subr.mxu0 0.0
    %1511 = vmatpush1.msra.mxu0 %v1433
    %1512 = vmatprep.subr.mxu0 0.0
    %1513 = vmatpush1.msra.mxu0 %v1432
    %1514 = vmatprep.subr.mxu0 0.0
    %1515 = vmatpush2.msra.mxu0 0.0
    %1516 = vmatprep.subr.mxu0 0.0
    %1517 = vmatpush2.msra.mxu0 0.0
    %1518 = vmatprep.subr.mxu0 0.0
    %1519 = vmatpush2.msra.mxu0 0.0
    %1520 = vmatprep.subr.mxu0 0.0
    %1521 = vmatpush2.msra.mxu0 0.0
    %1522 = vmatprep.subr.mxu0 0.0
    %1523 = vmatpush2.msra.mxu0 0.0
    %1524 = vmatprep.subr.mxu0 0.0
    %1525 = vmatpush2.msra.mxu0 0.0
    %1526 = vmatprep.subr.mxu0 0.0
    %1527 = vmatpush2.msra.mxu0 0.0
    %1528 = vmatprep.subr.mxu0 0.0
    %1529 = vmatpush2.msra.mxu0 0.0
    %1530 = vmatprep.subr.mxu0 0.0
    %1531 = vmatpush2.msra.mxu0 0.0
    %1532 = vmatprep.subr.mxu0 0.0
    %1533 = vmatpush2.msra.mxu0 0.0
    %1534 = vmatprep.subr.mxu0 0.0
    %1535 = vmatpush2.msra.mxu0 0.0
    %1536 = vmatprep.subr.mxu0 0.0
    %1537 = vmatpush2.msra.mxu0 0.0
    %1538 = vmatprep.subr.mxu0 0.0
    %1539 = vmatpush2.msra.mxu0 0.0
    %1540 = vmatprep.subr.mxu0 0.0
    %1541 = vmatpush2.msra.mxu0 0.0
    %1542 = vmatprep.subr.mxu0 0.0
    %1543 = vmatpush2.msra.mxu0 0.0
    %1544 = vmatprep.subr.mxu0 0.0
    %1545 = vmatpush2.msra.mxu0 0.0
    %1546 = vmatprep.mubr.f32.mxu0 0.0
    %1547 = vmatmul.mubr.f32.gmra.mxu0 %v1435
    %v1548 = vpop.f32.mrf.mxu0
    %v1549 = vadd.f32 0.0, %v1548
    %v1550 = vpop.f32.mrf.mxu0
    %1551 = vmatprep.mubr.f32.mxu0 0.0
    %1552 = vmatmul.mubr.f32.gmra.mxu0 %v1438
    %v1553 = vpop.f32.mrf.mxu0
    %v1554 = vadd.f32 0.0, %v1553
    %v1555 = vpop.f32.mrf.mxu0
    %1556 = vmatprep.mubr.f32.mxu0 0.0
    %1557 = vmatmul.mubr.f32.gmra.mxu0 %v1441
    %v1558 = vpop.f32.mrf.mxu0
    %v1559 = vadd.f32 0.0, %v1558
    %v1560 = vpop.f32.mrf.mxu0
    %1561 = vmatprep.mubr.f32.mxu0 0.0
    %1562 = vmatmul.mubr.f32.gmra.mxu0 %v1444
    %v1563 = vpop.f32.mrf.mxu0
    %v1564 = vadd.f32 0.0, %v1563
    %v1565 = vpop.f32.mrf.mxu0
    %1566 = vmatprep.mubr.f32.mxu0 0.0
    %1567 = vmatmul.mubr.f32.gmra.mxu0 %v1447
    %v1568 = vpop.f32.mrf.mxu0
    %v1569 = vadd.f32 0.0, %v1568
    %v1570 = vpop.f32.mrf.mxu0
    %1571 = vmatprep.mubr.f32.mxu0 0.0
    %1572 = vmatmul.mubr.f32.gmra.mxu0 %v1450
    %v1573 = vpop.f32.mrf.mxu0
    %v1574 = vadd.f32 0.0, %v1573
    %v1575 = vpop.f32.mrf.mxu0
    %1576 = vmatprep.mubr.f32.mxu0 0.0
    %1577 = vmatmul.mubr.f32.gmra.mxu0 %v1453
    %v1578 = vpop.f32.mrf.mxu0
    %v1579 = vadd.f32 0.0, %v1578
    %v1580 = vpop.f32.mrf.mxu0
    %1581 = vmatprep.mubr.f32.mxu0 0.0
    %1582 = vmatmul.mubr.f32.gmra.mxu0 %v1456
    %v1583 = vpop.f32.mrf.mxu0
    %v1584 = vadd.f32 0.0, %v1583
    %v1585 = vpop.f32.mrf.mxu0
    %1586 = vmatprep.mubr.f32.mxu0 0.0
    %1587 = vmatmul.mubr.f32.gmra.mxu0 %v1459
    %v1588 = vpop.f32.mrf.mxu0
    %v1589 = vadd.f32 0.0, %v1588
    %v1590 = vpop.f32.mrf.mxu0
    %1591 = vmatprep.mubr.f32.mxu0 0.0
    %1592 = vmatmul.mubr.f32.gmra.mxu0 %v1462
    %v1593 = vpop.f32.mrf.mxu0
    %v1594 = vadd.f32 0.0, %v1593
    %v1595 = vpop.f32.mrf.mxu0
    %1596 = vmatprep.mubr.f32.mxu0 0.0
    %1597 = vmatmul.mubr.f32.gmra.mxu0 %v1465
    %v1598 = vpop.f32.mrf.mxu0
    %v1599 = vadd.f32 0.0, %v1598
    %v1600 = vpop.f32.mrf.mxu0
    %1601 = vmatprep.mubr.f32.mxu0 0.0
    %1602 = vmatmul.mubr.f32.gmra.mxu0 %v1468
    %v1603 = vpop.f32.mrf.mxu0
    %v1604 = vadd.f32 0.0, %v1603
    %v1605 = vpop.f32.mrf.mxu0
    %1606 = vmatprep.mubr.f32.mxu0 0.0
    %1607 = vmatmul.mubr.f32.gmra.mxu0 %v1471
    %v1608 = vpop.f32.mrf.mxu0
    %v1609 = vadd.f32 0.0, %v1608
    %v1610 = vpop.f32.mrf.mxu0
    %1611 = vmatprep.mubr.f32.mxu0 0.0
    %1612 = vmatmul.mubr.f32.gmra.mxu0 %v1474
    %v1613 = vpop.f32.mrf.mxu0
    %v1614 = vadd.f32 0.0, %v1613
    %v1615 = vpop.f32.mrf.mxu0
    %1616 = vmatprep.mubr.f32.mxu0 0.0
    %1617 = vmatmul.mubr.f32.gmra.mxu0 %v1477
    %v1618 = vpop.f32.mrf.mxu0
    %v1619 = vadd.f32 0.0, %v1618
    %v1620 = vpop.f32.mrf.mxu0
    %1621 = vmatprep.mubr.f32.mxu0 0.0
    %1622 = vmatmul.mubr.f32.gmra.mxu0 %v1480
    %v1623 = vpop.f32.mrf.mxu0
    %v1624 = vadd.f32 0.0, %v1623
    %v1625 = vpop.f32.mrf.mxu0
    %1626 = vdwg.mxu0
    %v1627 = vadd.f32 %v1415, %v1549
    %v1628 = vadd.f32 %v1416, %v1554
    %v1629 = vadd.f32 %v1417, %v1559
    %v1630 = vadd.f32 %v1418, %v1564
    %v1631 = vadd.f32 %v1419, %v1569
    %v1632 = vadd.f32 %v1420, %v1574
    %v1633 = vadd.f32 %v1421, %v1579
    %v1634 = vadd.f32 %v1422, %v1584
    %v1635 = vadd.f32 %v1423, %v1589
    %v1636 = vadd.f32 %v1424, %v1594
    %v1637 = vadd.f32 %v1425, %v1599
    %v1638 = vadd.f32 %v1426, %v1604
    %v1639 = vadd.f32 %v1427, %v1609
    %v1640 = vadd.f32 %v1428, %v1614
    %v1641 = vadd.f32 %v1429, %v1619
    %v1642 = vadd.f32 %v1430, %v1624
    %s1643 = scalar_lea.vmem %s7, 64
    %v1644 = vld [vmem:[%s1643] sm:$0xff]
    %v1645 = vld [vmem:[%s1643 + $0x8] sm:$0xff]
    %v1647 = vsel %vm832, %v749, 0
    %v1650 = vsel %vm832, %v754, 0
    %v1653 = vsel %vm832, %v759, 0
    %v1656 = vsel %vm832, %v764, 0
    %v1659 = vsel %vm832, %v769, 0
    %v1662 = vsel %vm832, %v774, 0
    %v1665 = vsel %vm832, %v779, 0
    %v1668 = vsel %vm832, %v784, 0
    %v1671 = vsel %vm832, %v789, 0
    %v1674 = vsel %vm832, %v794, 0
    %v1677 = vsel %vm832, %v799, 0
    %v1680 = vsel %vm832, %v804, 0
    %v1683 = vsel %vm832, %v809, 0
    %v1686 = vsel %vm832, %v814, 0
    %v1689 = vsel %vm832, %v819, 0
    %v1692 = vsel %vm832, %v824, 0
    %1694 = vmatprep.subr.mxu0 0.0
    %1695 = vmatpush1.msra.mxu0 0.0
    %1696 = vmatprep.subr.mxu0 0.0
    %1697 = vmatpush1.msra.mxu0 0.0
    %1698 = vmatprep.subr.mxu0 0.0
    %1699 = vmatpush1.msra.mxu0 0.0
    %1700 = vmatprep.subr.mxu0 0.0
    %1701 = vmatpush1.msra.mxu0 0.0
    %1702 = vmatprep.subr.mxu0 0.0
    %1703 = vmatpush1.msra.mxu0 0.0
    %1704 = vmatprep.subr.mxu0 0.0
    %1705 = vmatpush1.msra.mxu0 0.0
    %1706 = vmatprep.subr.mxu0 0.0
    %1707 = vmatpush1.msra.mxu0 0.0
    %1708 = vmatprep.subr.mxu0 0.0
    %1709 = vmatpush1.msra.mxu0 0.0
    %1710 = vmatprep.subr.mxu0 0.0
    %1711 = vmatpush1.msra.mxu0 0.0
    %1712 = vmatprep.subr.mxu0 0.0
    %1713 = vmatpush1.msra.mxu0 0.0
    %1714 = vmatprep.subr.mxu0 0.0
    %1715 = vmatpush1.msra.mxu0 0.0
    %1716 = vmatprep.subr.mxu0 0.0
    %1717 = vmatpush1.msra.mxu0 0.0
    %1718 = vmatprep.subr.mxu0 0.0
    %1719 = vmatpush1.msra.mxu0 0.0
    %1720 = vmatprep.subr.mxu0 0.0
    %1721 = vmatpush1.msra.mxu0 0.0
    %1722 = vmatprep.subr.mxu0 0.0
    %1723 = vmatpush1.msra.mxu0 %v1645
    %1724 = vmatprep.subr.mxu0 0.0
    %1725 = vmatpush1.msra.mxu0 %v1644
    %1726 = vmatprep.subr.mxu0 0.0
    %1727 = vmatpush2.msra.mxu0 0.0
    %1728 = vmatprep.subr.mxu0 0.0
    %1729 = vmatpush2.msra.mxu0 0.0
    %1730 = vmatprep.subr.mxu0 0.0
    %1731 = vmatpush2.msra.mxu0 0.0
    %1732 = vmatprep.subr.mxu0 0.0
    %1733 = vmatpush2.msra.mxu0 0.0
    %1734 = vmatprep.subr.mxu0 0.0
    %1735 = vmatpush2.msra.mxu0 0.0
    %1736 = vmatprep.subr.mxu0 0.0
    %1737 = vmatpush2.msra.mxu0 0.0
    %1738 = vmatprep.subr.mxu0 0.0
    %1739 = vmatpush2.msra.mxu0 0.0
    %1740 = vmatprep.subr.mxu0 0.0
    %1741 = vmatpush2.msra.mxu0 0.0
    %1742 = vmatprep.subr.mxu0 0.0
    %1743 = vmatpush2.msra.mxu0 0.0
    %1744 = vmatprep.subr.mxu0 0.0
    %1745 = vmatpush2.msra.mxu0 0.0
    %1746 = vmatprep.subr.mxu0 0.0
    %1747 = vmatpush2.msra.mxu0 0.0
    %1748 = vmatprep.subr.mxu0 0.0
    %1749 = vmatpush2.msra.mxu0 0.0
    %1750 = vmatprep.subr.mxu0 0.0
    %1751 = vmatpush2.msra.mxu0 0.0
    %1752 = vmatprep.subr.mxu0 0.0
    %1753 = vmatpush2.msra.mxu0 0.0
    %1754 = vmatprep.subr.mxu0 0.0
    %1755 = vmatpush2.msra.mxu0 0.0
    %1756 = vmatprep.subr.mxu0 0.0
    %1757 = vmatpush2.msra.mxu0 0.0
    %1758 = vmatprep.mubr.f32.mxu0 0.0
    %1759 = vmatmul.mubr.f32.gmra.mxu0 %v1647
    %v1760 = vpop.f32.mrf.mxu0
    %v1761 = vadd.f32 0.0, %v1760
    %v1762 = vpop.f32.mrf.mxu0
    %1763 = vmatprep.mubr.f32.mxu0 0.0
    %1764 = vmatmul.mubr.f32.gmra.mxu0 %v1650
    %v1765 = vpop.f32.mrf.mxu0
    %v1766 = vadd.f32 0.0, %v1765
    %v1767 = vpop.f32.mrf.mxu0
    %1768 = vmatprep.mubr.f32.mxu0 0.0
    %1769 = vmatmul.mubr.f32.gmra.mxu0 %v1653
    %v1770 = vpop.f32.mrf.mxu0
    %v1771 = vadd.f32 0.0, %v1770
    %v1772 = vpop.f32.mrf.mxu0
    %1773 = vmatprep.mubr.f32.mxu0 0.0
    %1774 = vmatmul.mubr.f32.gmra.mxu0 %v1656
    %v1775 = vpop.f32.mrf.mxu0
    %v1776 = vadd.f32 0.0, %v1775
    %v1777 = vpop.f32.mrf.mxu0
    %1778 = vmatprep.mubr.f32.mxu0 0.0
    %1779 = vmatmul.mubr.f32.gmra.mxu0 %v1659
    %v1780 = vpop.f32.mrf.mxu0
    %v1781 = vadd.f32 0.0, %v1780
    %v1782 = vpop.f32.mrf.mxu0
    %1783 = vmatprep.mubr.f32.mxu0 0.0
    %1784 = vmatmul.mubr.f32.gmra.mxu0 %v1662
    %v1785 = vpop.f32.mrf.mxu0
    %v1786 = vadd.f32 0.0, %v1785
    %v1787 = vpop.f32.mrf.mxu0
    %1788 = vmatprep.mubr.f32.mxu0 0.0
    %1789 = vmatmul.mubr.f32.gmra.mxu0 %v1665
    %v1790 = vpop.f32.mrf.mxu0
    %v1791 = vadd.f32 0.0, %v1790
    %v1792 = vpop.f32.mrf.mxu0
    %1793 = vmatprep.mubr.f32.mxu0 0.0
    %1794 = vmatmul.mubr.f32.gmra.mxu0 %v1668
    %v1795 = vpop.f32.mrf.mxu0
    %v1796 = vadd.f32 0.0, %v1795
    %v1797 = vpop.f32.mrf.mxu0
    %1798 = vmatprep.mubr.f32.mxu0 0.0
    %1799 = vmatmul.mubr.f32.gmra.mxu0 %v1671
    %v1800 = vpop.f32.mrf.mxu0
    %v1801 = vadd.f32 0.0, %v1800
    %v1802 = vpop.f32.mrf.mxu0
    %1803 = vmatprep.mubr.f32.mxu0 0.0
    %1804 = vmatmul.mubr.f32.gmra.mxu0 %v1674
    %v1805 = vpop.f32.mrf.mxu0
    %v1806 = vadd.f32 0.0, %v1805
    %v1807 = vpop.f32.mrf.mxu0
    %1808 = vmatprep.mubr.f32.mxu0 0.0
    %1809 = vmatmul.mubr.f32.gmra.mxu0 %v1677
    %v1810 = vpop.f32.mrf.mxu0
    %v1811 = vadd.f32 0.0, %v1810
    %v1812 = vpop.f32.mrf.mxu0
    %1813 = vmatprep.mubr.f32.mxu0 0.0
    %1814 = vmatmul.mubr.f32.gmra.mxu0 %v1680
    %v1815 = vpop.f32.mrf.mxu0
    %v1816 = vadd.f32 0.0, %v1815
    %v1817 = vpop.f32.mrf.mxu0
    %1818 = vmatprep.mubr.f32.mxu0 0.0
    %1819 = vmatmul.mubr.f32.gmra.mxu0 %v1683
    %v1820 = vpop.f32.mrf.mxu0
    %v1821 = vadd.f32 0.0, %v1820
    %v1822 = vpop.f32.mrf.mxu0
    %1823 = vmatprep.mubr.f32.mxu0 0.0
    %1824 = vmatmul.mubr.f32.gmra.mxu0 %v1686
    %v1825 = vpop.f32.mrf.mxu0
    %v1826 = vadd.f32 0.0, %v1825
    %v1827 = vpop.f32.mrf.mxu0
    %1828 = vmatprep.mubr.f32.mxu0 0.0
    %1829 = vmatmul.mubr.f32.gmra.mxu0 %v1689
    %v1830 = vpop.f32.mrf.mxu0
    %v1831 = vadd.f32 0.0, %v1830
    %v1832 = vpop.f32.mrf.mxu0
    %1833 = vmatprep.mubr.f32.mxu0 0.0
    %1834 = vmatmul.mubr.f32.gmra.mxu0 %v1692
    %v1835 = vpop.f32.mrf.mxu0
    %v1836 = vadd.f32 0.0, %v1835
    %v1837 = vpop.f32.mrf.mxu0
    %1838 = vdwg.mxu0
    %v1839 = vadd.f32 %v1627, %v1761
    %v1840 = vadd.f32 %v1628, %v1766
    %v1841 = vadd.f32 %v1629, %v1771
    %v1842 = vadd.f32 %v1630, %v1776
    %v1843 = vadd.f32 %v1631, %v1781
    %v1844 = vadd.f32 %v1632, %v1786
    %v1845 = vadd.f32 %v1633, %v1791
    %v1846 = vadd.f32 %v1634, %v1796
    %v1847 = vadd.f32 %v1635, %v1801
    %v1848 = vadd.f32 %v1636, %v1806
    %v1849 = vadd.f32 %v1637, %v1811
    %v1850 = vadd.f32 %v1638, %v1816
    %v1851 = vadd.f32 %v1639, %v1821
    %v1852 = vadd.f32 %v1640, %v1826
    %v1853 = vadd.f32 %v1641, %v1831
    %v1854 = vadd.f32 %v1642, %v1836
    %v1855 = vld [vmem:[%s2] sm:$0xff]
    %v1856 = vld [vmem:[%s2 + $0x8] sm:$0xff]
    %v1857 = vld [vmem:[%s2 + $0x10] sm:$0xff]
    %v1858 = vld [vmem:[%s2 + $0x18] sm:$0xff]
    %v1859 = vld [vmem:[%s2 + $0x20] sm:$0xff]
    %v1860 = vld [vmem:[%s2 + $0x28] sm:$0xff]
    %v1861 = vld [vmem:[%s2 + $0x30] sm:$0xff]
    %v1862 = vld [vmem:[%s2 + $0x38] sm:$0xff]
    %v1863 = vld [vmem:[%s2 + $0x40] sm:$0xff]
    %v1864 = vld [vmem:[%s2 + $0x48] sm:$0xff]
    %v1865 = vld [vmem:[%s2 + $0x50] sm:$0xff]
    %v1866 = vld [vmem:[%s2 + $0x58] sm:$0xff]
    %v1867 = vld [vmem:[%s2 + $0x60] sm:$0xff]
    %v1868 = vld [vmem:[%s2 + $0x68] sm:$0xff]
    %v1869 = vld [vmem:[%s2 + $0x70] sm:$0xff]
    %v1870 = vld [vmem:[%s2 + $0x78] sm:$0xff]
    %1872 = vset.pattern.permute.xlu0 0
    %1873 = vperm.xlu0 %1872, %v1855
    %v1874 = vpop.permute.xlu0 %1873
    %1877 = vset.pattern.permute.xlu0 0
    %1878 = vperm.xlu0 %1877, %v1856
    %v1879 = vpop.permute.xlu0 %1878
    %1882 = vset.pattern.permute.xlu0 0
    %1883 = vperm.xlu0 %1882, %v1857
    %v1884 = vpop.permute.xlu0 %1883
    %1887 = vset.pattern.permute.xlu0 0
    %1888 = vperm.xlu0 %1887, %v1858
    %v1889 = vpop.permute.xlu0 %1888
    %1892 = vset.pattern.permute.xlu0 0
    %1893 = vperm.xlu0 %1892, %v1859
    %v1894 = vpop.permute.xlu0 %1893
    %1897 = vset.pattern.permute.xlu0 0
    %1898 = vperm.xlu0 %1897, %v1860
    %v1899 = vpop.permute.xlu0 %1898
    %1902 = vset.pattern.permute.xlu0 0
    %1903 = vperm.xlu0 %1902, %v1861
    %v1904 = vpop.permute.xlu0 %1903
    %1907 = vset.pattern.permute.xlu0 0
    %1908 = vperm.xlu0 %1907, %v1862
    %v1909 = vpop.permute.xlu0 %1908
    %1912 = vset.pattern.permute.xlu0 0
    %1913 = vperm.xlu0 %1912, %v1863
    %v1914 = vpop.permute.xlu0 %1913
    %1917 = vset.pattern.permute.xlu0 0
    %1918 = vperm.xlu0 %1917, %v1864
    %v1919 = vpop.permute.xlu0 %1918
    %1922 = vset.pattern.permute.xlu0 0
    %1923 = vperm.xlu0 %1922, %v1865
    %v1924 = vpop.permute.xlu0 %1923
    %1927 = vset.pattern.permute.xlu0 0
    %1928 = vperm.xlu0 %1927, %v1866
    %v1929 = vpop.permute.xlu0 %1928
    %1932 = vset.pattern.permute.xlu0 0
    %1933 = vperm.xlu0 %1932, %v1867
    %v1934 = vpop.permute.xlu0 %1933
    %1937 = vset.pattern.permute.xlu0 0
    %1938 = vperm.xlu0 %1937, %v1868
    %v1939 = vpop.permute.xlu0 %1938
    %1942 = vset.pattern.permute.xlu0 0
    %1943 = vperm.xlu0 %1942, %v1869
    %v1944 = vpop.permute.xlu0 %1943
    %1947 = vset.pattern.permute.xlu0 0
    %1948 = vperm.xlu0 %1947, %v1870
    %v1949 = vpop.permute.xlu0 %1948
    %v1951 = vadd.f32 %v1839, %v1874
    %v1952 = vadd.f32 %v1840, %v1879
    %v1953 = vadd.f32 %v1841, %v1884
    %v1954 = vadd.f32 %v1842, %v1889
    %v1955 = vadd.f32 %v1843, %v1894
    %v1956 = vadd.f32 %v1844, %v1899
    %v1957 = vadd.f32 %v1845, %v1904
    %v1958 = vadd.f32 %v1846, %v1909
    %v1959 = vadd.f32 %v1847, %v1914
    %v1960 = vadd.f32 %v1848, %v1919
    %v1961 = vadd.f32 %v1849, %v1924
    %v1962 = vadd.f32 %v1850, %v1929
    %v1963 = vadd.f32 %v1851, %v1934
    %v1964 = vadd.f32 %v1852, %v1939
    %v1965 = vadd.f32 %v1853, %v1944
    %v1966 = vadd.f32 %v1854, %v1949
    %v1967 = vmax.f32 %v1951, 0.0
    %v1968 = vmax.f32 %v1952, 0.0
    %v1969 = vmax.f32 %v1953, 0.0
    %v1970 = vmax.f32 %v1954, 0.0
    %v1971 = vmax.f32 %v1955, 0.0
    %v1972 = vmax.f32 %v1956, 0.0
    %v1973 = vmax.f32 %v1957, 0.0
    %v1974 = vmax.f32 %v1958, 0.0
    %v1975 = vmax.f32 %v1959, 0.0
    %v1976 = vmax.f32 %v1960, 0.0
    %v1977 = vmax.f32 %v1961, 0.0
    %v1978 = vmax.f32 %v1962, 0.0
    %v1979 = vmax.f32 %v1963, 0.0
    %v1980 = vmax.f32 %v1964, 0.0
    %v1981 = vmax.f32 %v1965, 0.0
    %v1982 = vmax.f32 %v1966, 0.0
    %v1983 = vld [vmem:[%s3] sm:$0xff]
    %v1984 = vld [vmem:[%s3 + $0x8] sm:$0xff]
    %v1985 = vld [vmem:[%s3 + $0x10] sm:$0xff]
    %v1986 = vld [vmem:[%s3 + $0x18] sm:$0xff]
    %v1987 = vld [vmem:[%s3 + $0x20] sm:$0xff]
    %v1988 = vld [vmem:[%s3 + $0x28] sm:$0xff]
    %v1989 = vld [vmem:[%s3 + $0x30] sm:$0xff]
    %v1990 = vld [vmem:[%s3 + $0x38] sm:$0xff]
    %v1991 = vld [vmem:[%s4] sm:$0xff]
    %v1992 = vld [vmem:[%s4 + $0x8] sm:$0xff]
    %v1993 = vld [vmem:[%s4 + $0x10] sm:$0xff]
    %v1994 = vld [vmem:[%s4 + $0x18] sm:$0xff]
    %v1995 = vld [vmem:[%s4 + $0x20] sm:$0xff]
    %v1996 = vld [vmem:[%s4 + $0x28] sm:$0xff]
    %v1997 = vld [vmem:[%s4 + $0x30] sm:$0xff]
    %v1998 = vld [vmem:[%s4 + $0x38] sm:$0xff]
    %2000 = vset.pattern.permute.xlu0 0
    %2001 = vperm.xlu0 %2000, %v1991
    %v2002 = vpop.permute.xlu0 %2001
    %2005 = vset.pattern.permute.xlu0 0
    %2006 = vperm.xlu0 %2005, %v1992
    %v2007 = vpop.permute.xlu0 %2006
    %2010 = vset.pattern.permute.xlu0 0
    %2011 = vperm.xlu0 %2010, %v1993
    %v2012 = vpop.permute.xlu0 %2011
    %2015 = vset.pattern.permute.xlu0 0
    %2016 = vperm.xlu0 %2015, %v1994
    %v2017 = vpop.permute.xlu0 %2016
    %2020 = vset.pattern.permute.xlu0 0
    %2021 = vperm.xlu0 %2020, %v1995
    %v2022 = vpop.permute.xlu0 %2021
    %2025 = vset.pattern.permute.xlu0 0
    %2026 = vperm.xlu0 %2025, %v1996
    %v2027 = vpop.permute.xlu0 %2026
    %2030 = vset.pattern.permute.xlu0 0
    %2031 = vperm.xlu0 %2030, %v1997
    %v2032 = vpop.permute.xlu0 %2031
    %2035 = vset.pattern.permute.xlu0 0
    %2036 = vperm.xlu0 %2035, %v1998
    %v2037 = vpop.permute.xlu0 %2036
    %2039 = vmatprep.subr.mxu0 0.0
    %2040 = vmatpush1.msra.mxu0 %v1982
    %2041 = vmatprep.subr.mxu0 0.0
    %2042 = vmatpush1.msra.mxu0 %v1981
    %2043 = vmatprep.subr.mxu0 0.0
    %2044 = vmatpush1.msra.mxu0 %v1980
    %2045 = vmatprep.subr.mxu0 0.0
    %2046 = vmatpush1.msra.mxu0 %v1979
    %2047 = vmatprep.subr.mxu0 0.0
    %2048 = vmatpush1.msra.mxu0 %v1978
    %2049 = vmatprep.subr.mxu0 0.0
    %2050 = vmatpush1.msra.mxu0 %v1977
    %2051 = vmatprep.subr.mxu0 0.0
    %2052 = vmatpush1.msra.mxu0 %v1976
    %2053 = vmatprep.subr.mxu0 0.0
    %2054 = vmatpush1.msra.mxu0 %v1975
    %2055 = vmatprep.subr.mxu0 0.0
    %2056 = vmatpush1.msra.mxu0 %v1974
    %2057 = vmatprep.subr.mxu0 0.0
    %2058 = vmatpush1.msra.mxu0 %v1973
    %2059 = vmatprep.subr.mxu0 0.0
    %2060 = vmatpush1.msra.mxu0 %v1972
    %2061 = vmatprep.subr.mxu0 0.0
    %2062 = vmatpush1.msra.mxu0 %v1971
    %2063 = vmatprep.subr.mxu0 0.0
    %2064 = vmatpush1.msra.mxu0 %v1970
    %2065 = vmatprep.subr.mxu0 0.0
    %2066 = vmatpush1.msra.mxu0 %v1969
    %2067 = vmatprep.subr.mxu0 0.0
    %2068 = vmatpush1.msra.mxu0 %v1968
    %2069 = vmatprep.subr.mxu0 0.0
    %2070 = vmatpush1.msra.mxu0 %v1967
    %2071 = vmatprep.subr.mxu0 0.0
    %2072 = vmatpush2.msra.mxu0 0.0
    %2073 = vmatprep.subr.mxu0 0.0
    %2074 = vmatpush2.msra.mxu0 0.0
    %2075 = vmatprep.subr.mxu0 0.0
    %2076 = vmatpush2.msra.mxu0 0.0
    %2077 = vmatprep.subr.mxu0 0.0
    %2078 = vmatpush2.msra.mxu0 0.0
    %2079 = vmatprep.subr.mxu0 0.0
    %2080 = vmatpush2.msra.mxu0 0.0
    %2081 = vmatprep.subr.mxu0 0.0
    %2082 = vmatpush2.msra.mxu0 0.0
    %2083 = vmatprep.subr.mxu0 0.0
    %2084 = vmatpush2.msra.mxu0 0.0
    %2085 = vmatprep.subr.mxu0 0.0
    %2086 = vmatpush2.msra.mxu0 0.0
    %2087 = vmatprep.subr.mxu0 0.0
    %2088 = vmatpush2.msra.mxu0 0.0
    %2089 = vmatprep.subr.mxu0 0.0
    %2090 = vmatpush2.msra.mxu0 0.0
    %2091 = vmatprep.subr.mxu0 0.0
    %2092 = vmatpush2.msra.mxu0 0.0
    %2093 = vmatprep.subr.mxu0 0.0
    %2094 = vmatpush2.msra.mxu0 0.0
    %2095 = vmatprep.subr.mxu0 0.0
    %2096 = vmatpush2.msra.mxu0 0.0
    %2097 = vmatprep.subr.mxu0 0.0
    %2098 = vmatpush2.msra.mxu0 0.0
    %2099 = vmatprep.subr.mxu0 0.0
    %2100 = vmatpush2.msra.mxu0 0.0
    %2101 = vmatprep.subr.mxu0 0.0
    %2102 = vmatpush2.msra.mxu0 0.0
    %2103 = vmatprep.mubr.f32.mxu0 0.0
    %2104 = vmatmul.mubr.f32.gmra.mxu0 %v1983
    %v2105 = vpop.f32.mrf.mxu0
    %v2106 = vadd.f32 %v2002, %v2105
    %v2107 = vpop.f32.mrf.mxu0
    %2108 = vmatprep.mubr.f32.mxu0 0.0
    %2109 = vmatmul.mubr.f32.gmra.mxu0 %v1984
    %v2110 = vpop.f32.mrf.mxu0
    %v2111 = vadd.f32 %v2007, %v2110
    %v2112 = vpop.f32.mrf.mxu0
    %2113 = vmatprep.mubr.f32.mxu0 0.0
    %2114 = vmatmul.mubr.f32.gmra.mxu0 %v1985
    %v2115 = vpop.f32.mrf.mxu0
    %v2116 = vadd.f32 %v2012, %v2115
    %v2117 = vpop.f32.mrf.mxu0
    %2118 = vmatprep.mubr.f32.mxu0 0.0
    %2119 = vmatmul.mubr.f32.gmra.mxu0 %v1986
    %v2120 = vpop.f32.mrf.mxu0
    %v2121 = vadd.f32 %v2017, %v2120
    %v2122 = vpop.f32.mrf.mxu0
    %2123 = vmatprep.mubr.f32.mxu0 0.0
    %2124 = vmatmul.mubr.f32.gmra.mxu0 %v1987
    %v2125 = vpop.f32.mrf.mxu0
    %v2126 = vadd.f32 %v2022, %v2125
    %v2127 = vpop.f32.mrf.mxu0
    %2128 = vmatprep.mubr.f32.mxu0 0.0
    %2129 = vmatmul.mubr.f32.gmra.mxu0 %v1988
    %v2130 = vpop.f32.mrf.mxu0
    %v2131 = vadd.f32 %v2027, %v2130
    %v2132 = vpop.f32.mrf.mxu0
    %2133 = vmatprep.mubr.f32.mxu0 0.0
    %2134 = vmatmul.mubr.f32.gmra.mxu0 %v1989
    %v2135 = vpop.f32.mrf.mxu0
    %v2136 = vadd.f32 %v2032, %v2135
    %v2137 = vpop.f32.mrf.mxu0
    %2138 = vmatprep.mubr.f32.mxu0 0.0
    %2139 = vmatmul.mubr.f32.gmra.mxu0 %v1990
    %v2140 = vpop.f32.mrf.mxu0
    %v2141 = vadd.f32 %v2037, %v2140
    %v2142 = vpop.f32.mrf.mxu0
    %2143 = vdwg.mxu0
    %v2144 = vtanh.pop %v2106
    %v2145 = vtanh.pop %v2111
    %v2146 = vtanh.pop %v2116
    %v2147 = vtanh.pop %v2121
    %v2148 = vtanh.pop %v2126
    %v2149 = vtanh.pop %v2131
    %v2150 = vtanh.pop %v2136
    %v2151 = vtanh.pop %v2141
    %v2152 = vld [vmem:[%s5] sm:$0xff]
    %v2153 = vld [vmem:[%s5 + $0x8] sm:$0xff]
    %v2154 = vld [vmem:[%s5 + $0x10] sm:$0xff]
    %v2155 = vld [vmem:[%s5 + $0x18] sm:$0xff]
    %v2156 = vld [vmem:[%s5 + $0x20] sm:$0xff]
    %v2157 = vld [vmem:[%s5 + $0x28] sm:$0xff]
    %v2158 = vld [vmem:[%s5 + $0x30] sm:$0xff]
    %v2159 = vld [vmem:[%s5 + $0x38] sm:$0xff]
    %v2160 = vld [vmem:[%s5 + $0x40] sm:$0xff]
    %v2161 = vld [vmem:[%s5 + $0x48] sm:$0xff]
    %v2162 = vld [vmem:[%s5 + $0x50] sm:$0xff]
    %v2163 = vld [vmem:[%s5 + $0x58] sm:$0xff]
    %v2164 = vld [vmem:[%s5 + $0x60] sm:$0xff]
    %v2165 = vld [vmem:[%s5 + $0x68] sm:$0xff]
    %v2166 = vld [vmem:[%s5 + $0x70] sm:$0xff]
    %v2167 = vld [vmem:[%s5 + $0x78] sm:$0xff]
    %v2168 = vld [vmem:[%s6] sm:$0xff]
    %v2169 = vld [vmem:[%s6 + $0x8] sm:$0xff]
    %v2170 = vld [vmem:[%s6 + $0x10] sm:$0xff]
    %v2171 = vld [vmem:[%s6 + $0x18] sm:$0xff]
    %v2172 = vld [vmem:[%s6 + $0x20] sm:$0xff]
    %v2173 = vld [vmem:[%s6 + $0x28] sm:$0xff]
    %v2174 = vld [vmem:[%s6 + $0x30] sm:$0xff]
    %v2175 = vld [vmem:[%s6 + $0x38] sm:$0xff]
    %v2176 = vld [vmem:[%s6 + $0x40] sm:$0xff]
    %v2177 = vld [vmem:[%s6 + $0x48] sm:$0xff]
    %v2178 = vld [vmem:[%s6 + $0x50] sm:$0xff]
    %v2179 = vld [vmem:[%s6 + $0x58] sm:$0xff]
    %v2180 = vld [vmem:[%s6 + $0x60] sm:$0xff]
    %v2181 = vld [vmem:[%s6 + $0x68] sm:$0xff]
    %v2182 = vld [vmem:[%s6 + $0x70] sm:$0xff]
    %v2183 = vld [vmem:[%s6 + $0x78] sm:$0xff]
    %2185 = vset.pattern.permute.xlu0 0
    %2186 = vperm.xlu0 %2185, %v2168
    %v2187 = vpop.permute.xlu0 %2186
    %2190 = vset.pattern.permute.xlu0 0
    %2191 = vperm.xlu0 %2190, %v2169
    %v2192 = vpop.permute.xlu0 %2191
    %2195 = vset.pattern.permute.xlu0 0
    %2196 = vperm.xlu0 %2195, %v2170
    %v2197 = vpop.permute.xlu0 %2196
    %2200 = vset.pattern.permute.xlu0 0
    %2201 = vperm.xlu0 %2200, %v2171
    %v2202 = vpop.permute.xlu0 %2201
    %2205 = vset.pattern.permute.xlu0 0
    %2206 = vperm.xlu0 %2205, %v2172
    %v2207 = vpop.permute.xlu0 %2206
    %2210 = vset.pattern.permute.xlu0 0
    %2211 = vperm.xlu0 %2210, %v2173
    %v2212 = vpop.permute.xlu0 %2211
    %2215 = vset.pattern.permute.xlu0 0
    %2216 = vperm.xlu0 %2215, %v2174
    %v2217 = vpop.permute.xlu0 %2216
    %2220 = vset.pattern.permute.xlu0 0
    %2221 = vperm.xlu0 %2220, %v2175
    %v2222 = vpop.permute.xlu0 %2221
    %2225 = vset.pattern.permute.xlu0 0
    %2226 = vperm.xlu0 %2225, %v2176
    %v2227 = vpop.permute.xlu0 %2226
    %2230 = vset.pattern.permute.xlu0 0
    %2231 = vperm.xlu0 %2230, %v2177
    %v2232 = vpop.permute.xlu0 %2231
    %2235 = vset.pattern.permute.xlu0 0
    %2236 = vperm.xlu0 %2235, %v2178
    %v2237 = vpop.permute.xlu0 %2236
    %2240 = vset.pattern.permute.xlu0 0
    %2241 = vperm.xlu0 %2240, %v2179
    %v2242 = vpop.permute.xlu0 %2241
    %2245 = vset.pattern.permute.xlu0 0
    %2246 = vperm.xlu0 %2245, %v2180
    %v2247 = vpop.permute.xlu0 %2246
    %2250 = vset.pattern.permute.xlu0 0
    %2251 = vperm.xlu0 %2250, %v2181
    %v2252 = vpop.permute.xlu0 %2251
    %2255 = vset.pattern.permute.xlu0 0
    %2256 = vperm.xlu0 %2255, %v2182
    %v2257 = vpop.permute.xlu0 %2256
    %2260 = vset.pattern.permute.xlu0 0
    %2261 = vperm.xlu0 %2260, %v2183
    %v2262 = vpop.permute.xlu0 %2261
    %v2265 = vsel %vm121, %v2152, 0
    %v2268 = vsel %vm121, %v2153, 0
    %v2271 = vsel %vm121, %v2154, 0
    %v2274 = vsel %vm121, %v2155, 0
    %v2277 = vsel %vm121, %v2156, 0
    %v2280 = vsel %vm121, %v2157, 0
    %v2283 = vsel %vm121, %v2158, 0
    %v2286 = vsel %vm121, %v2159, 0
    %v2289 = vsel %vm121, %v2160, 0
    %v2292 = vsel %vm121, %v2161, 0
    %v2295 = vsel %vm121, %v2162, 0
    %v2298 = vsel %vm121, %v2163, 0
    %v2301 = vsel %vm121, %v2164, 0
    %v2304 = vsel %vm121, %v2165, 0
    %v2307 = vsel %vm121, %v2166, 0
    %v2310 = vsel %vm121, %v2167, 0
    %2312 = vmatprep.subr.mxu0 0.0
    %2313 = vmatpush1.msra.mxu0 0.0
    %2314 = vmatprep.subr.mxu0 0.0
    %2315 = vmatpush1.msra.mxu0 0.0
    %2316 = vmatprep.subr.mxu0 0.0
    %2317 = vmatpush1.msra.mxu0 0.0
    %2318 = vmatprep.subr.mxu0 0.0
    %2319 = vmatpush1.msra.mxu0 0.0
    %2320 = vmatprep.subr.mxu0 0.0
    %2321 = vmatpush1.msra.mxu0 0.0
    %2322 = vmatprep.subr.mxu0 0.0
    %2323 = vmatpush1.msra.mxu0 0.0
    %2324 = vmatprep.subr.mxu0 0.0
    %2325 = vmatpush1.msra.mxu0 0.0
    %2326 = vmatprep.subr.mxu0 0.0
    %2327 = vmatpush1.msra.mxu0 0.0
    %2328 = vmatprep.subr.mxu0 0.0
    %2329 = vmatpush1.msra.mxu0 %v2151
    %2330 = vmatprep.subr.mxu0 0.0
    %2331 = vmatpush1.msra.mxu0 %v2150
    %2332 = vmatprep.subr.mxu0 0.0
    %2333 = vmatpush1.msra.mxu0 %v2149
    %2334 = vmatprep.subr.mxu0 0.0
    %2335 = vmatpush1.msra.mxu0 %v2148
    %2336 = vmatprep.subr.mxu0 0.0
    %2337 = vmatpush1.msra.mxu0 %v2147
    %2338 = vmatprep.subr.mxu0 0.0
    %2339 = vmatpush1.msra.mxu0 %v2146
    %2340 = vmatprep.subr.mxu0 0.0
    %2341 = vmatpush1.msra.mxu0 %v2145
    %2342 = vmatprep.subr.mxu0 0.0
    %2343 = vmatpush1.msra.mxu0 %v2144
    %2344 = vmatprep.subr.mxu0 0.0
    %2345 = vmatpush2.msra.mxu0 0.0
    %2346 = vmatprep.subr.mxu0 0.0
    %2347 = vmatpush2.msra.mxu0 0.0
    %2348 = vmatprep.subr.mxu0 0.0
    %2349 = vmatpush2.msra.mxu0 0.0
    %2350 = vmatprep.subr.mxu0 0.0
    %2351 = vmatpush2.msra.mxu0 0.0
    %2352 = vmatprep.subr.mxu0 0.0
    %2353 = vmatpush2.msra.mxu0 0.0
    %2354 = vmatprep.subr.mxu0 0.0
    %2355 = vmatpush2.msra.mxu0 0.0
    %2356 = vmatprep.subr.mxu0 0.0
    %2357 = vmatpush2.msra.mxu0 0.0
    %2358 = vmatprep.subr.mxu0 0.0
    %2359 = vmatpush2.msra.mxu0 0.0
    %2360 = vmatprep.subr.mxu0 0.0
    %2361 = vmatpush2.msra.mxu0 0.0
    %2362 = vmatprep.subr.mxu0 0.0
    %2363 = vmatpush2.msra.mxu0 0.0
    %2364 = vmatprep.subr.mxu0 0.0
    %2365 = vmatpush2.msra.mxu0 0.0
    %2366 = vmatprep.subr.mxu0 0.0
    %2367 = vmatpush2.msra.mxu0 0.0
    %2368 = vmatprep.subr.mxu0 0.0
    %2369 = vmatpush2.msra.mxu0 0.0
    %2370 = vmatprep.subr.mxu0 0.0
    %2371 = vmatpush2.msra.mxu0 0.0
    %2372 = vmatprep.subr.mxu0 0.0
    %2373 = vmatpush2.msra.mxu0 0.0
    %2374 = vmatprep.subr.mxu0 0.0
    %2375 = vmatpush2.msra.mxu0 0.0
    %2376 = vmatprep.mubr.f32.mxu0 0.0
    %2377 = vmatmul.mubr.f32.gmra.mxu0 %v2265
    %v2378 = vpop.f32.mrf.mxu0
    %v2379 = vadd.f32 %v2187, %v2378
    %v2380 = vpop.f32.mrf.mxu0
    %2381 = vmatprep.mubr.f32.mxu0 0.0
    %2382 = vmatmul.mubr.f32.gmra.mxu0 %v2268
    %v2383 = vpop.f32.mrf.mxu0
    %v2384 = vadd.f32 %v2192, %v2383
    %v2385 = vpop.f32.mrf.mxu0
    %2386 = vmatprep.mubr.f32.mxu0 0.0
    %2387 = vmatmul.mubr.f32.gmra.mxu0 %v2271
    %v2388 = vpop.f32.mrf.mxu0
    %v2389 = vadd.f32 %v2197, %v2388
    %v2390 = vpop.f32.mrf.mxu0
    %2391 = vmatprep.mubr.f32.mxu0 0.0
    %2392 = vmatmul.mubr.f32.gmra.mxu0 %v2274
    %v2393 = vpop.f32.mrf.mxu0
    %v2394 = vadd.f32 %v2202, %v2393
    %v2395 = vpop.f32.mrf.mxu0
    %2396 = vmatprep.mubr.f32.mxu0 0.0
    %2397 = vmatmul.mubr.f32.gmra.mxu0 %v2277
    %v2398 = vpop.f32.mrf.mxu0
    %v2399 = vadd.f32 %v2207, %v2398
    %v2400 = vpop.f32.mrf.mxu0
    %2401 = vmatprep.mubr.f32.mxu0 0.0
    %2402 = vmatmul.mubr.f32.gmra.mxu0 %v2280
    %v2403 = vpop.f32.mrf.mxu0
    %v2404 = vadd.f32 %v2212, %v2403
    %v2405 = vpop.f32.mrf.mxu0
    %2406 = vmatprep.mubr.f32.mxu0 0.0
    %2407 = vmatmul.mubr.f32.gmra.mxu0 %v2283
    %v2408 = vpop.f32.mrf.mxu0
    %v2409 = vadd.f32 %v2217, %v2408
    %v2410 = vpop.f32.mrf.mxu0
    %2411 = vmatprep.mubr.f32.mxu0 0.0
    %2412 = vmatmul.mubr.f32.gmra.mxu0 %v2286
    %v2413 = vpop.f32.mrf.mxu0
    %v2414 = vadd.f32 %v2222, %v2413
    %v2415 = vpop.f32.mrf.mxu0
    %2416 = vmatprep.mubr.f32.mxu0 0.0
    %2417 = vmatmul.mubr.f32.gmra.mxu0 %v2289
    %v2418 = vpop.f32.mrf.mxu0
    %v2419 = vadd.f32 %v2227, %v2418
    %v2420 = vpop.f32.mrf.mxu0
    %2421 = vmatprep.mubr.f32.mxu0 0.0
    %2422 = vmatmul.mubr.f32.gmra.mxu0 %v2292
    %v2423 = vpop.f32.mrf.mxu0
    %v2424 = vadd.f32 %v2232, %v2423
    %v2425 = vpop.f32.mrf.mxu0
    %2426 = vmatprep.mubr.f32.mxu0 0.0
    %2427 = vmatmul.mubr.f32.gmra.mxu0 %v2295
    %v2428 = vpop.f32.mrf.mxu0
    %v2429 = vadd.f32 %v2237, %v2428
    %v2430 = vpop.f32.mrf.mxu0
    %2431 = vmatprep.mubr.f32.mxu0 0.0
    %2432 = vmatmul.mubr.f32.gmra.mxu0 %v2298
    %v2433 = vpop.f32.mrf.mxu0
    %v2434 = vadd.f32 %v2242, %v2433
    %v2435 = vpop.f32.mrf.mxu0
    %2436 = vmatprep.mubr.f32.mxu0 0.0
    %2437 = vmatmul.mubr.f32.gmra.mxu0 %v2301
    %v2438 = vpop.f32.mrf.mxu0
    %v2439 = vadd.f32 %v2247, %v2438
    %v2440 = vpop.f32.mrf.mxu0
    %2441 = vmatprep.mubr.f32.mxu0 0.0
    %2442 = vmatmul.mubr.f32.gmra.mxu0 %v2304
    %v2443 = vpop.f32.mrf.mxu0
    %v2444 = vadd.f32 %v2252, %v2443
    %v2445 = vpop.f32.mrf.mxu0
    %2446 = vmatprep.mubr.f32.mxu0 0.0
    %2447 = vmatmul.mubr.f32.gmra.mxu0 %v2307
    %v2448 = vpop.f32.mrf.mxu0
    %v2449 = vadd.f32 %v2257, %v2448
    %v2450 = vpop.f32.mrf.mxu0
    %2451 = vmatprep.mubr.f32.mxu0 0.0
    %2452 = vmatmul.mubr.f32.gmra.mxu0 %v2310
    %v2453 = vpop.f32.mrf.mxu0
    %v2454 = vadd.f32 %v2262, %v2453
    %v2455 = vpop.f32.mrf.mxu0
    %2456 = vdwg.mxu0
    %v2457 = vsel %vm832, %v2379, -inf
    %2458 = vmax.xlane.f32.xlu0 %v2457
    %v2459 = vpop.xlane.xlu0 %2458
    %v2460 = vsel %vm832, %v2384, -inf
    %2461 = vmax.xlane.f32.xlu0 %v2460
    %v2462 = vpop.xlane.xlu0 %2461
    %v2463 = vsel %vm832, %v2389, -inf
    %2464 = vmax.xlane.f32.xlu0 %v2463
    %v2465 = vpop.xlane.xlu0 %2464
    %v2466 = vsel %vm832, %v2394, -inf
    %2467 = vmax.xlane.f32.xlu0 %v2466
    %v2468 = vpop.xlane.xlu0 %2467
    %v2469 = vsel %vm832, %v2399, -inf
    %2470 = vmax.xlane.f32.xlu0 %v2469
    %v2471 = vpop.xlane.xlu0 %2470
    %v2472 = vsel %vm832, %v2404, -inf
    %2473 = vmax.xlane.f32.xlu0 %v2472
    %v2474 = vpop.xlane.xlu0 %2473
    %v2475 = vsel %vm832, %v2409, -inf
    %2476 = vmax.xlane.f32.xlu0 %v2475
    %v2477 = vpop.xlane.xlu0 %2476
    %v2478 = vsel %vm832, %v2414, -inf
    %2479 = vmax.xlane.f32.xlu0 %v2478
    %v2480 = vpop.xlane.xlu0 %2479
    %v2481 = vsel %vm832, %v2419, -inf
    %2482 = vmax.xlane.f32.xlu0 %v2481
    %v2483 = vpop.xlane.xlu0 %2482
    %v2484 = vsel %vm832, %v2424, -inf
    %2485 = vmax.xlane.f32.xlu0 %v2484
    %v2486 = vpop.xlane.xlu0 %2485
    %v2487 = vsel %vm832, %v2429, -inf
    %2488 = vmax.xlane.f32.xlu0 %v2487
    %v2489 = vpop.xlane.xlu0 %2488
    %v2490 = vsel %vm832, %v2434, -inf
    %2491 = vmax.xlane.f32.xlu0 %v2490
    %v2492 = vpop.xlane.xlu0 %2491
    %v2493 = vsel %vm832, %v2439, -inf
    %2494 = vmax.xlane.f32.xlu0 %v2493
    %v2495 = vpop.xlane.xlu0 %2494
    %v2496 = vsel %vm832, %v2444, -inf
    %2497 = vmax.xlane.f32.xlu0 %v2496
    %v2498 = vpop.xlane.xlu0 %2497
    %v2499 = vsel %vm832, %v2449, -inf
    %2500 = vmax.xlane.f32.xlu0 %v2499
    %v2501 = vpop.xlane.xlu0 %2500
    %v2502 = vsel %vm832, %v2454, -inf
    %2503 = vmax.xlane.f32.xlu0 %v2502
    %v2504 = vpop.xlane.xlu0 %2503
    %v2505 = vsub.f32 %v2379, %v2459
    %v2506 = vsub.f32 %v2384, %v2462
    %v2507 = vsub.f32 %v2389, %v2465
    %v2508 = vsub.f32 %v2394, %v2468
    %v2509 = vsub.f32 %v2399, %v2471
    %v2510 = vsub.f32 %v2404, %v2474
    %v2511 = vsub.f32 %v2409, %v2477
    %v2512 = vsub.f32 %v2414, %v2480
    %v2513 = vsub.f32 %v2419, %v2483
    %v2514 = vsub.f32 %v2424, %v2486
    %v2515 = vsub.f32 %v2429, %v2489
    %v2516 = vsub.f32 %v2434, %v2492
    %v2517 = vsub.f32 %v2439, %v2495
    %v2518 = vsub.f32 %v2444, %v2498
    %v2519 = vsub.f32 %v2449, %v2501
    %v2520 = vsub.f32 %v2454, %v2504
    %v2521 = vmul.f32 %v2505, 1.442695
    %v2522 = vpow.pop %v2521
    %v2523 = vmul.f32 %v2506, 1.442695
    %v2524 = vpow.pop %v2523
    %v2525 = vmul.f32 %v2507, 1.442695
    %v2526 = vpow.pop %v2525
    %v2527 = vmul.f32 %v2508, 1.442695
    %v2528 = vpow.pop %v2527
    %v2529 = vmul.f32 %v2509, 1.442695
    %v2530 = vpow.pop %v2529
    %v2531 = vmul.f32 %v2510, 1.442695
    %v2532 = vpow.pop %v2531
    %v2533 = vmul.f32 %v2511, 1.442695
    %v2534 = vpow.pop %v2533
    %v2535 = vmul.f32 %v2512, 1.442695
    %v2536 = vpow.pop %v2535
    %v2537 = vmul.f32 %v2513, 1.442695
    %v2538 = vpow.pop %v2537
    %v2539 = vmul.f32 %v2514, 1.442695
    %v2540 = vpow.pop %v2539
    %v2541 = vmul.f32 %v2515, 1.442695
    %v2542 = vpow.pop %v2541
    %v2543 = vmul.f32 %v2516, 1.442695
    %v2544 = vpow.pop %v2543
    %v2545 = vmul.f32 %v2517, 1.442695
    %v2546 = vpow.pop %v2545
    %v2547 = vmul.f32 %v2518, 1.442695
    %v2548 = vpow.pop %v2547
    %v2549 = vmul.f32 %v2519, 1.442695
    %v2550 = vpow.pop %v2549
    %v2551 = vmul.f32 %v2520, 1.442695
    %v2552 = vpow.pop %v2551
    %v2553 = vsel %vm832, %v2522, 0.0
    %2554 = vadd.xlane.f32.xlu0 %v2553
    %v2555 = vpop.xlane.xlu0 %2554
    %v2556 = vsel %vm832, %v2524, 0.0
    %2557 = vadd.xlane.f32.xlu0 %v2556
    %v2558 = vpop.xlane.xlu0 %2557
    %v2559 = vsel %vm832, %v2526, 0.0
    %2560 = vadd.xlane.f32.xlu0 %v2559
    %v2561 = vpop.xlane.xlu0 %2560
    %v2562 = vsel %vm832, %v2528, 0.0
    %2563 = vadd.xlane.f32.xlu0 %v2562
    %v2564 = vpop.xlane.xlu0 %2563
    %v2565 = vsel %vm832, %v2530, 0.0
    %2566 = vadd.xlane.f32.xlu0 %v2565
    %v2567 = vpop.xlane.xlu0 %2566
    %v2568 = vsel %vm832, %v2532, 0.0
    %2569 = vadd.xlane.f32.xlu0 %v2568
    %v2570 = vpop.xlane.xlu0 %2569
    %v2571 = vsel %vm832, %v2534, 0.0
    %2572 = vadd.xlane.f32.xlu0 %v2571
    %v2573 = vpop.xlane.xlu0 %2572
    %v2574 = vsel %vm832, %v2536, 0.0
    %2575 = vadd.xlane.f32.xlu0 %v2574
    %v2576 = vpop.xlane.xlu0 %2575
    %v2577 = vsel %vm832, %v2538, 0.0
    %2578 = vadd.xlane.f32.xlu0 %v2577
    %v2579 = vpop.xlane.xlu0 %2578
    %v2580 = vsel %vm832, %v2540, 0.0
    %2581 = vadd.xlane.f32.xlu0 %v2580
    %v2582 = vpop.xlane.xlu0 %2581
    %v2583 = vsel %vm832, %v2542, 0.0
    %2584 = vadd.xlane.f32.xlu0 %v2583
    %v2585 = vpop.xlane.xlu0 %2584
    %v2586 = vsel %vm832, %v2544, 0.0
    %2587 = vadd.xlane.f32.xlu0 %v2586
    %v2588 = vpop.xlane.xlu0 %2587
    %v2589 = vsel %vm832, %v2546, 0.0
    %2590 = vadd.xlane.f32.xlu0 %v2589
    %v2591 = vpop.xlane.xlu0 %2590
    %v2592 = vsel %vm832, %v2548, 0.0
    %2593 = vadd.xlane.f32.xlu0 %v2592
    %v2594 = vpop.xlane.xlu0 %2593
    %v2595 = vsel %vm832, %v2550, 0.0
    %2596 = vadd.xlane.f32.xlu0 %v2595
    %v2597 = vpop.xlane.xlu0 %2596
    %v2598 = vsel %vm832, %v2552, 0.0
    %2599 = vadd.xlane.f32.xlu0 %v2598
    %v2600 = vpop.xlane.xlu0 %2599
    %v2601 = vrcp.pop %v2555
    %v2602 = vrcp.pop %v2558
    %v2603 = vrcp.pop %v2561
    %v2604 = vrcp.pop %v2564
    %v2605 = vrcp.pop %v2567
    %v2606 = vrcp.pop %v2570
    %v2607 = vrcp.pop %v2573
    %v2608 = vrcp.pop %v2576
    %v2609 = vrcp.pop %v2579
    %v2610 = vrcp.pop %v2582
    %v2611 = vrcp.pop %v2585
    %v2612 = vrcp.pop %v2588
    %v2613 = vrcp.pop %v2591
    %v2614 = vrcp.pop %v2594
    %v2615 = vrcp.pop %v2597
    %v2616 = vrcp.pop %v2600
    %v2617 = vmul.f32 %v2522, %v2601
    %v2618 = vmul.f32 %v2524, %v2602
    %v2619 = vmul.f32 %v2526, %v2603
    %v2620 = vmul.f32 %v2528, %v2604
    %v2621 = vmul.f32 %v2530, %v2605
    %v2622 = vmul.f32 %v2532, %v2606
    %v2623 = vmul.f32 %v2534, %v2607
    %v2624 = vmul.f32 %v2536, %v2608
    %v2625 = vmul.f32 %v2538, %v2609
    %v2626 = vmul.f32 %v2540, %v2610
    %v2627 = vmul.f32 %v2542, %v2611
    %v2628 = vmul.f32 %v2544, %v2612
    %v2629 = vmul.f32 %v2546, %v2613
    %v2630 = vmul.f32 %v2548, %v2614
    %v2631 = vmul.f32 %v2550, %v2615
    %v2632 = vmul.f32 %v2552, %v2616
    %v2633 = vld [vmem:[%s8] sm:$0x3]
    %2634 = vmatprep.subr.mxu0 0.0
    %2635 = vmatpush1.msra.mxu0 %v2632
    %2636 = vmatprep.subr.mxu0 0.0
    %2637 = vmatpush1.msra.mxu0 %v2631
    %2638 = vmatprep.subr.mxu0 0.0
    %2639 = vmatpush1.msra.mxu0 %v2630
    %2640 = vmatprep.subr.mxu0 0.0
    %2641 = vmatpush1.msra.mxu0 %v2629
    %2642 = vmatprep.subr.mxu0 0.0
    %2643 = vmatpush1.msra.mxu0 %v2628
    %2644 = vmatprep.subr.mxu0 0.0
    %2645 = vmatpush1.msra.mxu0 %v2627
    %2646 = vmatprep.subr.mxu0 0.0
    %2647 = vmatpush1.msra.mxu0 %v2626
    %2648 = vmatprep.subr.mxu0 0.0
    %2649 = vmatpush1.msra.mxu0 %v2625
    %2650 = vmatprep.subr.mxu0 0.0
    %2651 = vmatpush1.msra.mxu0 %v2624
    %2652 = vmatprep.subr.mxu0 0.0
    %2653 = vmatpush1.msra.mxu0 %v2623
    %2654 = vmatprep.subr.mxu0 0.0
    %2655 = vmatpush1.msra.mxu0 %v2622
    %2656 = vmatprep.subr.mxu0 0.0
    %2657 = vmatpush1.msra.mxu0 %v2621
    %2658 = vmatprep.subr.mxu0 0.0
    %2659 = vmatpush1.msra.mxu0 %v2620
    %2660 = vmatprep.subr.mxu0 0.0
    %2661 = vmatpush1.msra.mxu0 %v2619
    %2662 = vmatprep.subr.mxu0 0.0
    %2663 = vmatpush1.msra.mxu0 %v2618
    %2664 = vmatprep.subr.mxu0 0.0
    %2665 = vmatpush1.msra.mxu0 %v2617
    %2666 = vmatprep.subr.mxu0 0.0
    %2667 = vmatpush2.msra.mxu0 0.0
    %2668 = vmatprep.subr.mxu0 0.0
    %2669 = vmatpush2.msra.mxu0 0.0
    %2670 = vmatprep.subr.mxu0 0.0
    %2671 = vmatpush2.msra.mxu0 0.0
    %2672 = vmatprep.subr.mxu0 0.0
    %2673 = vmatpush2.msra.mxu0 0.0
    %2674 = vmatprep.subr.mxu0 0.0
    %2675 = vmatpush2.msra.mxu0 0.0
    %2676 = vmatprep.subr.mxu0 0.0
    %2677 = vmatpush2.msra.mxu0 0.0
    %2678 = vmatprep.subr.mxu0 0.0
    %2679 = vmatpush2.msra.mxu0 0.0
    %2680 = vmatprep.subr.mxu0 0.0
    %2681 = vmatpush2.msra.mxu0 0.0
    %2682 = vmatprep.subr.mxu0 0.0
    %2683 = vmatpush2.msra.mxu0 0.0
    %2684 = vmatprep.subr.mxu0 0.0
    %2685 = vmatpush2.msra.mxu0 0.0
    %2686 = vmatprep.subr.mxu0 0.0
    %2687 = vmatpush2.msra.mxu0 0.0
    %2688 = vmatprep.subr.mxu0 0.0
    %2689 = vmatpush2.msra.mxu0 0.0
    %2690 = vmatprep.subr.mxu0 0.0
    %2691 = vmatpush2.msra.mxu0 0.0
    %2692 = vmatprep.subr.mxu0 0.0
    %2693 = vmatpush2.msra.mxu0 0.0
    %2694 = vmatprep.subr.mxu0 0.0
    %2695 = vmatpush2.msra.mxu0 0.0
    %2696 = vmatprep.subr.mxu0 0.0
    %2697 = vmatpush2.msra.mxu0 0.0
    %2698 = vmatprep.mubr.f32.mxu0 0.0
    %2699 = vmatmul.mubr.f32.gmra.mxu0 %v2633
    %v2700 = vpop.f32.mrf.mxu0
    %v2701 = vadd.f32 0.0, %v2700
    %v2702 = vpop.f32.mrf.mxu0
    %2703 = vdwg.mxu0
    %vm2704 = vcmp.gt.f32.partialorder %v2701, 0.192
    %v2705 = vsel %vm2704, 1, 0
    %v2706 = vcvt.s32.f32 %v2705
    %vm2707 = vcmask 123904
    %2708 = vst.msk [vmem:[#allocation2] sm:$0x3] %vm2707, %v2706
    // Predicated region
    $region38: #{vad_forward.1} parent=1 // pred_check
      _
    $region39: #{vad_forward.1} parent=1 // pred_check_branch
      %2710 = sbr.rel (0) target = $region41
    $region40: #{vad_forward.1} parent=1 // pred_region
      %s2712 = ssub.s32 32, 32
      %2713 = vsyncadd [#allocation3], %s2712
      %s2715 = sshll.u32 [#allocation2], 4
      %s2716 = int_to_ptr.vmem [resolvable:$true] %s2715
      %2718 = dma.vmem_to_hbm [thread:$0]  %s2716, 32, %s9, [#allocation3]
    $region41: #{vad_forward.1} parent=1 // pred_fallthru
      _
    // Predicated region
    $region42: #{vad_forward.1} parent=1 // pred_check
      _
    $region43: #{vad_forward.1} parent=1 // pred_check_branch
      %2720 = sbr.rel (0) target = $region45
    $region44: #{vad_forward.1} parent=1 // pred_region
      %2721 = dma.done [#allocation3], 32
    $region45: #{vad_forward.1} parent=1 // pred_fallthru
      _
    %2722 = vsyncpa [#allocation3], 1

</llo_original>
